<compile_context>
chip_gen: v5e
topology: v5e:2x2
jax: 0.10.0
libtpu: 0.0.40
codegen_flags: <defaults>
</compile_context>

<pallas_src>
import jax
import jax.numpy as jnp
from jax.experimental import pallas as pl
from jax.experimental.pallas import tpu as pltpu

# ---------------- problem sizes (consistent with the module) -----------------
WAYPOINTS = 10          # state_dim['waypoints']
COMPANION = 5           # state_dim['companion_vehicle']  -> veh input = 2*5 = 10
LIGHT = 3               # state_dim['light']
EGO = 6                 # state_dim['ego_vehicle']
HIDDEN = 64             # encoder hidden size
ONE_STATE = WAYPOINTS + 2 * COMPANION + LIGHT          # 23
STATE_DIM = 3 * ONE_STATE + EGO                        # 75
ACTION_PARAM = 4        # action_parameter_size
BATCH = 8

N1 = 12 * HIDDEN        # 768 : layer-1 fused output width (12 blocks of 64)
W2_LANE = 128           # per-lane layer-2 output width (64 enc + 2 score cols + pad)
NEG_SLOPE = 0.1         # nn.LeakyReLU(negative_slope=0.1)

# Rows of the bias block appended to the W1 slab (rows STATE_DIM .. STATE_DIM+5):
#   row 0        : B1  (layer-1 biases, 768 wide)
#   rows 1..3    : per-lane layer-2 bias: [ww_b (64) | o_bias | a_bias | 0...]
#   row 4        : B3  (fc bias with top-level ego path folded in, 256 wide)
#   row 5        : B4  (fc_out bias, 4 wide)
N_BIAS_ROWS = 6


def _leaky_relu(x, slope=NEG_SLOPE):
    return jnp.where(x >= 0, x, slope * x)


# ---------------------------------------------------------------------------
# Kernel
# ---------------------------------------------------------------------------
def policy_kernel(state_ref, w1b_ref, w2_ref, w3_ref, w4_ref, out_ref):
    """Whole PolicyNet_multi forward for one batch tile, fully in VMEM."""
    H = HIDDEN
    f32 = jnp.float32
    bf16 = jnp.bfloat16

    state = state_ref[...]                                   # [B, 75] f32
    ego_bf = state[:, 3 * ONE_STATE:].astype(bf16)           # [B, 6]

    # bias rows (shipped as bf16 rows of the W1 slab; cast back to f32 once)
    biases = w1b_ref[STATE_DIM:STATE_DIM + N_BIAS_ROWS, :].astype(f32)   # [6,768]
    b1 = biases[0:1, :]                                      # [1, 768]
    b3 = biases[4:5, :4 * H]                                 # [1, 256]
    b4 = biases[5:6, :ACTION_PARAM]                          # [1, 4]

    # ---- layer 1: all 12 tiny encoder matmuls as ONE bf16 MXU call ---------
    y1 = jnp.maximum(
        jnp.dot(state.astype(bf16), w1b_ref[0:STATE_DIM, :],
                preferred_element_type=f32) + b1, 0.0)       # [B, 768] f32
    y1_bf = y1.astype(bf16)

    # hidden starts as the folded top-level ego path (+ fc bias): ego @ (ego_w @ fc_blk)
    hidden = jnp.dot(ego_bf, w3_ref[3 * H:3 * H + EGO, :],
                     preferred_element_type=f32) + b3        # [B, 256] f32

    for i in range(3):                                       # left / center / right
        b2 = biases[1 + i:2 + i, :]                          # [1, 768]
        ww_b = b2[:, 0:H]                                    # [1, 64]
        o_bias = b2[:, H:H + 1]                              # [1, 1]
        a_bias = b2[:, H + 1:H + 2]                          # [1, 1]

        w2_i = w2_ref[:, i * W2_LANE:(i + 1) * W2_LANE]      # [64, 128] bf16
        base = i * 4 * H

        # 4 per-block dots against the shared lane weight (cols 0:64 = ww_w,
        # col 64 = folded ego_o column, col 65 = folded ego_a column).
        z_lane = jnp.dot(y1_bf[:, base:base + H], w2_i, preferred_element_type=f32)
        z_veh = jnp.dot(y1_bf[:, base + H:base + 2 * H], w2_i, preferred_element_type=f32)
        z_light = jnp.dot(y1_bf[:, base + 2 * H:base + 3 * H], w2_i, preferred_element_type=f32)
        z_ego = jnp.dot(y1_bf[:, base + 3 * H:base + 4 * H], w2_i, preferred_element_type=f32)

        lane_enc = z_lane[:, 0:H] + ww_b                     # [B, 64]
        veh_enc = z_veh[:, 0:H] + ww_b
        light_enc = z_light[:, 0:H] + ww_b
        so_lane = z_lane[:, H:H + 1] + o_bias                # ego_o(lane_enc)  [B,1]
        so_veh = z_veh[:, H:H + 1] + o_bias
        so_light = z_light[:, H:H + 1] + o_bias
        sa = z_ego[:, H + 1:H + 2] + a_bias                  # ego_a(ego_enc)   [B,1]

        s_lane = _leaky_relu(sa + so_lane)
        s_veh = _leaky_relu(sa + so_veh)
        s_light = _leaky_relu(sa + so_light)

        # elementwise softmax over three [B,1] scores (no concat / lane reduction)
        m = jnp.maximum(jnp.maximum(s_lane, s_veh), s_light)
        e_lane = jnp.exp(s_lane - m)
        e_veh = jnp.exp(s_veh - m)
        e_light = jnp.exp(s_light - m)
        inv = pl.reciprocal(e_lane + e_veh + e_light, approx=True)

        enc = (e_lane * lane_enc + e_veh * veh_enc + e_light * light_enc) * inv

        # partial fc contribution (replaces the 256-wide concat)
        hidden = hidden + jnp.dot(enc.astype(bf16),
                                  w3_ref[i * H:(i + 1) * H, :],
                                  preferred_element_type=f32)

    hidden = jnp.maximum(hidden, 0.0)                        # [B, 256] f32

    out_ref[...] = jnp.tanh(
        jnp.dot(hidden, w4_ref[...], preferred_element_type=f32) + b4)   # [B, 4]


def policy_net_multi(state, packed):
    """One pallas_call, no grid (everything fits trivially in VMEM)."""
    vmem = pl.BlockSpec(memory_space=pltpu.MemorySpace.VMEM)
    w1b, w2, w3, w4 = packed
    bytes_accessed = (state.size * 4 + w1b.size * 2 + w2.size * 2
                      + w3.size * 2 + w4.size * 4 + state.shape[0] * ACTION_PARAM * 4)
    flops = 2 * state.shape[0] * (STATE_DIM * N1 + 12 * HIDDEN * W2_LANE
                                  + (3 * HIDDEN + EGO) * 4 * HIDDEN
                                  + 4 * HIDDEN * ACTION_PARAM)
    return pl.pallas_call(
        policy_kernel,
        out_shape=jax.ShapeDtypeStruct((state.shape[0], ACTION_PARAM), jnp.float32),
        in_specs=[vmem] * (1 + len(packed)),
        out_specs=vmem,
        cost_estimate=pl.CostEstimate(flops=flops,
                                      transcendentals=16 * state.shape[0],
                                      bytes_accessed=bytes_accessed),
    )(state, *packed)


# ---------------------------------------------------------------------------
# Deterministic parameter construction (PyTorch-layout: weights pre-transposed
# to [in, out], biases [1, out]) and wrapper-side packing into fused slabs.
# ---------------------------------------------------------------------------
def init_params(key):
    def nrm(k, shape, scale=0.1):
        return scale * jax.random.normal(k, shape, dtype=jnp.float32)

    keys = iter(jax.random.split(key, 64))
    p = []
    # stacked per-lane encoder params (left / center / right)
    p.append(nrm(next(keys), (3, WAYPOINTS, HIDDEN)))        # lane_w
    p.append(nrm(next(keys), (3, 1, HIDDEN)))                # lane_b
    p.append(nrm(next(keys), (3, 2 * COMPANION, HIDDEN)))    # veh_w
    p.append(nrm(next(keys), (3, 1, HIDDEN)))                # veh_b
    p.append(nrm(next(keys), (3, LIGHT, HIDDEN)))            # light_w
    p.append(nrm(next(keys), (3, 1, HIDDEN)))                # light_b
    p.append(nrm(next(keys), (3, EGO, HIDDEN)))              # encoder ego_w
    p.append(nrm(next(keys), (3, 1, HIDDEN)))                # encoder ego_b
    p.append(nrm(next(keys), (3, HIDDEN, HIDDEN)))           # w_w
    p.append(nrm(next(keys), (3, 1, HIDDEN)))                # w_b
    p.append(nrm(next(keys), (3, 1, HIDDEN)))                # ego_a weight (row vec)
    p.append(nrm(next(keys), (3, 1, 1)))                     # ego_a bias
    p.append(nrm(next(keys), (3, 1, HIDDEN)))                # ego_o weight (row vec)
    p.append(nrm(next(keys), (3, 1, 1)))                     # ego_o bias
    # top-level params
    p.append(nrm(next(keys), (EGO, HIDDEN)))                 # ego_encoder weight
    p.append(nrm(next(keys), (1, HIDDEN)))                   # ego_encoder bias
    p.append(nrm(next(keys), (4 * HIDDEN, 4 * HIDDEN)))      # fc weight  [256,256]
    p.append(nrm(next(keys), (1, 4 * HIDDEN)))               # fc bias
    p.append(nrm(next(keys), (4 * HIDDEN, ACTION_PARAM)))    # fc_out weight
    p.append(nrm(next(keys), (1, ACTION_PARAM)))             # fc_out bias
    return p


def pack_params(p):
    """Pack the 20 module parameters into 4 lane-dense kernel slabs."""
    (lane_w, lane_b, veh_w, veh_b, light_w, light_b, eenc_w, eenc_b,
     ww_w, ww_b, a_w, a_b, o_w, o_b,
     egom_w, egom_b, fc_w, fc_b, fo_w, fo_b) = p
    H = HIDDEN

    # ---- W1 [75, 768]: 12 output blocks j = i*4 + {lane,veh,light,ego} ------
    W1 = jnp.zeros((STATE_DIM, N1), jnp.float32)
    B1 = jnp.zeros((N1,), jnp.float32)
    for i in range(3):
        r0 = i * ONE_STATE
        c = (i * 4 + 0) * H
        W1 = W1.at[r0:r0 + WAYPOINTS, c:c + H].set(lane_w[i])
        B1 = B1.at[c:c + H].set(lane_b[i, 0])
        c = (i * 4 + 1) * H
        W1 = W1.at[r0 + WAYPOINTS:r0 + WAYPOINTS + 2 * COMPANION, c:c + H].set(veh_w[i])
        B1 = B1.at[c:c + H].set(veh_b[i, 0])
        c = (i * 4 + 2) * H
        W1 = W1.at[r0 + WAYPOINTS + 2 * COMPANION:r0 + ONE_STATE, c:c + H].set(light_w[i])
        B1 = B1.at[c:c + H].set(light_b[i, 0])
        c = (i * 4 + 3) * H
        W1 = W1.at[3 * ONE_STATE:, c:c + H].set(eenc_w[i])
        B1 = B1.at[c:c + H].set(eenc_b[i, 0])

    # ---- bias rows appended to W1 (see N_BIAS_ROWS layout above) -----------
    BIAS = jnp.zeros((N_BIAS_ROWS, N1), jnp.float32)
    BIAS = BIAS.at[0].set(B1)
    for i in range(3):
        o_bias = (ww_b[i] @ o_w[i].T + o_b[i])[0, 0]
        a_bias = (ww_b[i] @ a_w[i].T + a_b[i])[0, 0]
        BIAS = BIAS.at[1 + i, 0:H].set(ww_b[i, 0])
        BIAS = BIAS.at[1 + i, H].set(o_bias)
        BIAS = BIAS.at[1 + i, H + 1].set(a_bias)
    B3 = (fc_b + egom_b @ fc_w[3 * H:4 * H])[0]                  # [256]
    BIAS = BIAS.at[4, :4 * H].set(B3)
    BIAS = BIAS.at[5, :ACTION_PARAM].set(fo_b[0])

    W1B = jnp.concatenate([W1, BIAS], axis=0).astype(jnp.bfloat16)   # [81, 768]

    # ---- W2 [64, 384]: per lane i, cols i*128+(0:64)=ww_w, +64=o_col, +65=a_col
    W2 = jnp.zeros((H, 3 * W2_LANE), jnp.float32)
    for i in range(3):
        o_col = (ww_w[i] @ o_w[i].T)[:, 0]                       # [64]
        a_col = (ww_w[i] @ a_w[i].T)[:, 0]                       # [64]
        W2 = W2.at[:, i * W2_LANE:i * W2_LANE + H].set(ww_w[i])
        W2 = W2.at[:, i * W2_LANE + H].set(o_col)
        W2 = W2.at[:, i * W2_LANE + H + 1].set(a_col)
    W2 = W2.astype(jnp.bfloat16)

    # ---- W3 [200, 256]: fc row-blocks + top-level ego path folded through fc
    W3 = jnp.zeros((200, 4 * H), jnp.float32)
    W3 = W3.at[0:3 * H].set(fc_w[0:3 * H])
    W3 = W3.at[3 * H:3 * H + EGO].set(egom_w @ fc_w[3 * H:4 * H])
    W3 = W3.astype(jnp.bfloat16)

    # ---- W4 [256, 4] f32 (tiny; kept f32 for final-layer accuracy) ---------
    W4 = fo_w

    return (W1B, W2, W3, W4)


# ---------------------------------------------------------------------------
# Pure-JAX reference (mirrors the PyTorch forward, unfused, f32)
# ---------------------------------------------------------------------------
def reference_forward(state, p):
    (lane_w, lane_b, veh_w, veh_b, light_w, light_b, eenc_w, eenc_b,
     ww_w, ww_b, a_w, a_b, o_w, o_b,
     egom_w, egom_b, fc_w, fc_b, fo_w, fo_b) = p
    ego_info = state[:, 3 * ONE_STATE:]

    def encoder(i, lv):
        lane = lv[:, :WAYPOINTS]
        veh = lv[:, WAYPOINTS:WAYPOINTS + 2 * COMPANION]
        light = lv[:, WAYPOINTS + 2 * COMPANION:]
        lin = lambda x, w, b: x @ w + b
        relu = lambda x: jnp.maximum(x, 0.0)
        W, Wb = ww_w[i], ww_b[i]
        ego_enc = lin(relu(lin(ego_info, eenc_w[i], eenc_b[i])), W, Wb)
        lane_enc = lin(relu(lin(lane, lane_w[i], lane_b[i])), W, Wb)
        veh_enc = lin(relu(lin(veh, veh_w[i], veh_b[i])), W, Wb)
        light_enc = lin(relu(lin(light, light_w[i], light_b[i])), W, Wb)
        sa = jnp.sum(ego_enc * a_w[i], -1, keepdims=True) + a_b[i]
        so = lambda x: jnp.sum(x * o_w[i], -1, keepdims=True) + o_b[i]
        lrelu = lambda x: jnp.where(x >= 0, x, NEG_SLOPE * x)
        scores = jnp.concatenate(
            [lrelu(sa + so(lane_enc)), lrelu(sa + so(veh_enc)), lrelu(sa + so(light_enc))], 1)
        scores = jax.nn.softmax(scores, axis=1)
        return (scores[:, 0:1] * lane_enc + scores[:, 1:2] * veh_enc
                + scores[:, 2:3] * light_enc)

    encs = [encoder(i, state[:, i * ONE_STATE:(i + 1) * ONE_STATE]) for i in range(3)]
    ego_enc = ego_info @ egom_w + egom_b
    state_ = jnp.concatenate(encs + [ego_enc], axis=1)
    hidden = jnp.maximum(state_ @ fc_w + fc_b, 0.0)
    return jnp.tanh(hidden @ fo_w + fo_b)


if __name__ == "__main__":
    key = jax.random.PRNGKey(0)
    k_state, k_params = jax.random.split(key)
    state = jax.random.normal(k_state, (BATCH, STATE_DIM), dtype=jnp.float32)
    params = init_params(k_params)
    packed = pack_params(params)

    out = policy_net_multi(state, packed)
    out = jax.block_until_ready(out)

    ref = reference_forward(state, params)
    assert out.shape == (BATCH, ACTION_PARAM)
    # tolerance accounts for bf16 weight slabs (f32 accumulation) and
    # pl.reciprocal(approx=True) in the attention softmax.
    assert jnp.allclose(out, ref, atol=2e-2, rtol=2e-2), "mismatch vs JAX reference"
    print("KERNEL_OK")
</pallas_src>

<mosaic_0001>
module attributes {stable_mosaic.version = 11 : i64} {
  func.func @policy_kernel(%arg0: memref<8x75xf32, #tpu.memory_space<vmem>>, %arg1: memref<81x768xbf16, #tpu.memory_space<vmem>>, %arg2: memref<64x384xbf16, #tpu.memory_space<vmem>>, %arg3: memref<200x256xbf16, #tpu.memory_space<vmem>>, %arg4: memref<256x4xf32, #tpu.memory_space<vmem>>, %arg5: memref<8x4xf32, #tpu.memory_space<vmem>>) attributes {dimension_semantics = [], scalar_prefetch = 0 : i64, scratch_operands = 0 : i64, tpu.core_type = #tpu.core_type<tc>} {
    %c0 = arith.constant 0 : index
    %c0_0 = arith.constant 0 : index
    %0 = vector.load %arg0[%c0, %c0_0] : memref<8x75xf32, #tpu.memory_space<vmem>>, vector<8x75xf32>
    %1 = vector.extract_strided_slice %0 {offsets = [0, 69], sizes = [8, 6], strides = [1, 1]} : vector<8x75xf32> to vector<8x6xf32>
    %2 = arith.truncf %1 : vector<8x6xf32> to vector<8x6xbf16>
    %c75 = arith.constant 75 : index
    %c0_1 = arith.constant 0 : index
    %3 = vector.load %arg1[%c75, %c0_1] : memref<81x768xbf16, #tpu.memory_space<vmem>>, vector<6x768xbf16>
    %4 = arith.extf %3 : vector<6x768xbf16> to vector<6x768xf32>
    %5 = vector.extract_strided_slice %4 {offsets = [0, 0], sizes = [1, 768], strides = [1, 1]} : vector<6x768xf32> to vector<1x768xf32>
    %6 = vector.extract_strided_slice %4 {offsets = [4, 0], sizes = [1, 256], strides = [1, 1]} : vector<6x768xf32> to vector<1x256xf32>
    %7 = vector.extract_strided_slice %4 {offsets = [5, 0], sizes = [1, 4], strides = [1, 1]} : vector<6x768xf32> to vector<1x4xf32>
    %8 = arith.truncf %0 : vector<8x75xf32> to vector<8x75xbf16>
    %c0_2 = arith.constant 0 : index
    %c0_3 = arith.constant 0 : index
    %9 = vector.load %arg1[%c0_2, %c0_3] : memref<81x768xbf16, #tpu.memory_space<vmem>>, vector<75x768xbf16>
    %cst = arith.constant dense<0.000000e+00> : vector<8x768xf32>
    %10 = tpu.matmul %8, %9, %cst {dimension_numbers = #tpu.dot_dimension_numbers<[1], [0], [0], [1], [0, 0, 1, 1], [], []>} : vector<8x75xbf16>, vector<75x768xbf16>, vector<8x768xf32> -> vector<8x768xf32>
    %11 = vector.broadcast %5 : vector<1x768xf32> to vector<8x768xf32>
    %12 = arith.addf %10, %11 : vector<8x768xf32>
    %cst_4 = arith.constant 0.000000e+00 : f32
    %13 = vector.broadcast %cst_4 : f32 to vector<8x768xf32>
    %14 = arith.maximumf %12, %13 : vector<8x768xf32>
    %15 = arith.truncf %14 : vector<8x768xf32> to vector<8x768xbf16>
    %c192 = arith.constant 192 : index
    %c0_5 = arith.constant 0 : index
    %16 = vector.load %arg3[%c192, %c0_5] : memref<200x256xbf16, #tpu.memory_space<vmem>>, vector<6x256xbf16>
    %cst_6 = arith.constant dense<0.000000e+00> : vector<8x256xf32>
    %17 = tpu.matmul %2, %16, %cst_6 {dimension_numbers = #tpu.dot_dimension_numbers<[1], [0], [0], [1], [0, 0, 1, 1], [], []>} : vector<8x6xbf16>, vector<6x256xbf16>, vector<8x256xf32> -> vector<8x256xf32>
    %18 = vector.broadcast %6 : vector<1x256xf32> to vector<8x256xf32>
    %19 = arith.addf %17, %18 : vector<8x256xf32>
    %20 = vector.extract_strided_slice %4 {offsets = [1, 0], sizes = [1, 768], strides = [1, 1]} : vector<6x768xf32> to vector<1x768xf32>
    %21 = vector.extract_strided_slice %20 {offsets = [0, 0], sizes = [1, 64], strides = [1, 1]} : vector<1x768xf32> to vector<1x64xf32>
    %22 = vector.extract_strided_slice %20 {offsets = [0, 64], sizes = [1, 1], strides = [1, 1]} : vector<1x768xf32> to vector<1x1xf32>
    %23 = vector.extract_strided_slice %20 {offsets = [0, 65], sizes = [1, 1], strides = [1, 1]} : vector<1x768xf32> to vector<1x1xf32>
    %c0_7 = arith.constant 0 : index
    %c0_8 = arith.constant 0 : index
    %24 = vector.load %arg2[%c0_7, %c0_8] : memref<64x384xbf16, #tpu.memory_space<vmem>>, vector<64x128xbf16>
    %25 = vector.extract_strided_slice %15 {offsets = [0, 0], sizes = [8, 64], strides = [1, 1]} : vector<8x768xbf16> to vector<8x64xbf16>
    %cst_9 = arith.constant dense<0.000000e+00> : vector<8x128xf32>
    %26 = tpu.matmul %25, %24, %cst_9 {dimension_numbers = #tpu.dot_dimension_numbers<[1], [0], [0], [1], [0, 0, 1, 1], [], []>} : vector<8x64xbf16>, vector<64x128xbf16>, vector<8x128xf32> -> vector<8x128xf32>
    %27 = vector.extract_strided_slice %15 {offsets = [0, 64], sizes = [8, 64], strides = [1, 1]} : vector<8x768xbf16> to vector<8x64xbf16>
    %cst_10 = arith.constant dense<0.000000e+00> : vector<8x128xf32>
    %28 = tpu.matmul %27, %24, %cst_10 {dimension_numbers = #tpu.dot_dimension_numbers<[1], [0], [0], [1], [0, 0, 1, 1], [], []>} : vector<8x64xbf16>, vector<64x128xbf16>, vector<8x128xf32> -> vector<8x128xf32>
    %29 = vector.extract_strided_slice %15 {offsets = [0, 128], sizes = [8, 64], strides = [1, 1]} : vector<8x768xbf16> to vector<8x64xbf16>
    %cst_11 = arith.constant dense<0.000000e+00> : vector<8x128xf32>
    %30 = tpu.matmul %29, %24, %cst_11 {dimension_numbers = #tpu.dot_dimension_numbers<[1], [0], [0], [1], [0, 0, 1, 1], [], []>} : vector<8x64xbf16>, vector<64x128xbf16>, vector<8x128xf32> -> vector<8x128xf32>
    %31 = vector.extract_strided_slice %15 {offsets = [0, 192], sizes = [8, 64], strides = [1, 1]} : vector<8x768xbf16> to vector<8x64xbf16>
    %cst_12 = arith.constant dense<0.000000e+00> : vector<8x128xf32>
    %32 = tpu.matmul %31, %24, %cst_12 {dimension_numbers = #tpu.dot_dimension_numbers<[1], [0], [0], [1], [0, 0, 1, 1], [], []>} : vector<8x64xbf16>, vector<64x128xbf16>, vector<8x128xf32> -> vector<8x128xf32>
    %33 = vector.extract_strided_slice %26 {offsets = [0, 0], sizes = [8, 64], strides = [1, 1]} : vector<8x128xf32> to vector<8x64xf32>
    %34 = vector.broadcast %21 : vector<1x64xf32> to vector<8x64xf32>
    %35 = arith.addf %33, %34 : vector<8x64xf32>
    %36 = vector.extract_strided_slice %28 {offsets = [0, 0], sizes = [8, 64], strides = [1, 1]} : vector<8x128xf32> to vector<8x64xf32>
    %37 = vector.broadcast %21 : vector<1x64xf32> to vector<8x64xf32>
    %38 = arith.addf %36, %37 : vector<8x64xf32>
    %39 = vector.extract_strided_slice %30 {offsets = [0, 0], sizes = [8, 64], strides = [1, 1]} : vector<8x128xf32> to vector<8x64xf32>
    %40 = vector.broadcast %21 : vector<1x64xf32> to vector<8x64xf32>
    %41 = arith.addf %39, %40 : vector<8x64xf32>
    %42 = vector.extract_strided_slice %26 {offsets = [0, 64], sizes = [8, 1], strides = [1, 1]} : vector<8x128xf32> to vector<8x1xf32>
    %43 = vector.broadcast %22 : vector<1x1xf32> to vector<8x1xf32>
    %44 = arith.addf %42, %43 : vector<8x1xf32>
    %45 = vector.extract_strided_slice %28 {offsets = [0, 64], sizes = [8, 1], strides = [1, 1]} : vector<8x128xf32> to vector<8x1xf32>
    %46 = vector.broadcast %22 : vector<1x1xf32> to vector<8x1xf32>
    %47 = arith.addf %45, %46 : vector<8x1xf32>
    %48 = vector.extract_strided_slice %30 {offsets = [0, 64], sizes = [8, 1], strides = [1, 1]} : vector<8x128xf32> to vector<8x1xf32>
    %49 = vector.broadcast %22 : vector<1x1xf32> to vector<8x1xf32>
    %50 = arith.addf %48, %49 : vector<8x1xf32>
    %51 = vector.extract_strided_slice %32 {offsets = [0, 65], sizes = [8, 1], strides = [1, 1]} : vector<8x128xf32> to vector<8x1xf32>
    %52 = vector.broadcast %23 : vector<1x1xf32> to vector<8x1xf32>
    %53 = arith.addf %51, %52 : vector<8x1xf32>
    %54 = arith.addf %53, %44 : vector<8x1xf32>
    %cst_13 = arith.constant 0.000000e+00 : f32
    %55 = vector.broadcast %cst_13 : f32 to vector<8x1xf32>
    %56 = arith.cmpf oge, %54, %55 : vector<8x1xf32>
    %cst_14 = arith.constant 1.000000e-01 : f32
    %57 = vector.broadcast %cst_14 : f32 to vector<8x1xf32>
    %58 = arith.mulf %57, %54 : vector<8x1xf32>
    %59 = arith.select %56, %54, %58 : vector<8x1xi1>, vector<8x1xf32>
    %60 = arith.addf %53, %47 : vector<8x1xf32>
    %cst_15 = arith.constant 0.000000e+00 : f32
    %61 = vector.broadcast %cst_15 : f32 to vector<8x1xf32>
    %62 = arith.cmpf oge, %60, %61 : vector<8x1xf32>
    %cst_16 = arith.constant 1.000000e-01 : f32
    %63 = vector.broadcast %cst_16 : f32 to vector<8x1xf32>
    %64 = arith.mulf %63, %60 : vector<8x1xf32>
    %65 = arith.select %62, %60, %64 : vector<8x1xi1>, vector<8x1xf32>
    %66 = arith.addf %53, %50 : vector<8x1xf32>
    %cst_17 = arith.constant 0.000000e+00 : f32
    %67 = vector.broadcast %cst_17 : f32 to vector<8x1xf32>
    %68 = arith.cmpf oge, %66, %67 : vector<8x1xf32>
    %cst_18 = arith.constant 1.000000e-01 : f32
    %69 = vector.broadcast %cst_18 : f32 to vector<8x1xf32>
    %70 = arith.mulf %69, %66 : vector<8x1xf32>
    %71 = arith.select %68, %66, %70 : vector<8x1xi1>, vector<8x1xf32>
    %72 = arith.maximumf %59, %65 : vector<8x1xf32>
    %73 = arith.maximumf %72, %71 : vector<8x1xf32>
    %74 = arith.subf %59, %73 : vector<8x1xf32>
    %75 = math.exp %74 : vector<8x1xf32>
    %76 = arith.subf %65, %73 : vector<8x1xf32>
    %77 = math.exp %76 : vector<8x1xf32>
    %78 = arith.subf %71, %73 : vector<8x1xf32>
    %79 = math.exp %78 : vector<8x1xf32>
    %80 = arith.addf %75, %77 : vector<8x1xf32>
    %81 = arith.addf %80, %79 : vector<8x1xf32>
    %82 = tpu.reciprocal %81 {approx = true} : vector<8x1xf32> -> vector<8x1xf32>
    %83 = vector.broadcast %75 : vector<8x1xf32> to vector<8x64xf32>
    %84 = arith.mulf %83, %35 : vector<8x64xf32>
    %85 = vector.broadcast %77 : vector<8x1xf32> to vector<8x64xf32>
    %86 = arith.mulf %85, %38 : vector<8x64xf32>
    %87 = arith.addf %84, %86 : vector<8x64xf32>
    %88 = vector.broadcast %79 : vector<8x1xf32> to vector<8x64xf32>
    %89 = arith.mulf %88, %41 : vector<8x64xf32>
    %90 = arith.addf %87, %89 : vector<8x64xf32>
    %91 = vector.broadcast %82 : vector<8x1xf32> to vector<8x64xf32>
    %92 = arith.mulf %90, %91 : vector<8x64xf32>
    %93 = arith.truncf %92 : vector<8x64xf32> to vector<8x64xbf16>
    %c0_19 = arith.constant 0 : index
    %c0_20 = arith.constant 0 : index
    %94 = vector.load %arg3[%c0_19, %c0_20] : memref<200x256xbf16, #tpu.memory_space<vmem>>, vector<64x256xbf16>
    %cst_21 = arith.constant dense<0.000000e+00> : vector<8x256xf32>
    %95 = tpu.matmul %93, %94, %cst_21 {dimension_numbers = #tpu.dot_dimension_numbers<[1], [0], [0], [1], [0, 0, 1, 1], [], []>} : vector<8x64xbf16>, vector<64x256xbf16>, vector<8x256xf32> -> vector<8x256xf32>
    %96 = arith.addf %19, %95 : vector<8x256xf32>
    %97 = vector.extract_strided_slice %4 {offsets = [2, 0], sizes = [1, 768], strides = [1, 1]} : vector<6x768xf32> to vector<1x768xf32>
    %98 = vector.extract_strided_slice %97 {offsets = [0, 0], sizes = [1, 64], strides = [1, 1]} : vector<1x768xf32> to vector<1x64xf32>
    %99 = vector.extract_strided_slice %97 {offsets = [0, 64], sizes = [1, 1], strides = [1, 1]} : vector<1x768xf32> to vector<1x1xf32>
    %100 = vector.extract_strided_slice %97 {offsets = [0, 65], sizes = [1, 1], strides = [1, 1]} : vector<1x768xf32> to vector<1x1xf32>
    %c0_22 = arith.constant 0 : index
    %c128 = arith.constant 128 : index
    %101 = vector.load %arg2[%c0_22, %c128] : memref<64x384xbf16, #tpu.memory_space<vmem>>, vector<64x128xbf16>
    %102 = vector.extract_strided_slice %15 {offsets = [0, 256], sizes = [8, 64], strides = [1, 1]} : vector<8x768xbf16> to vector<8x64xbf16>
    %cst_23 = arith.constant dense<0.000000e+00> : vector<8x128xf32>
    %103 = tpu.matmul %102, %101, %cst_23 {dimension_numbers = #tpu.dot_dimension_numbers<[1], [0], [0], [1], [0, 0, 1, 1], [], []>} : vector<8x64xbf16>, vector<64x128xbf16>, vector<8x128xf32> -> vector<8x128xf32>
    %104 = vector.extract_strided_slice %15 {offsets = [0, 320], sizes = [8, 64], strides = [1, 1]} : vector<8x768xbf16> to vector<8x64xbf16>
    %cst_24 = arith.constant dense<0.000000e+00> : vector<8x128xf32>
    %105 = tpu.matmul %104, %101, %cst_24 {dimension_numbers = #tpu.dot_dimension_numbers<[1], [0], [0], [1], [0, 0, 1, 1], [], []>} : vector<8x64xbf16>, vector<64x128xbf16>, vector<8x128xf32> -> vector<8x128xf32>
    %106 = vector.extract_strided_slice %15 {offsets = [0, 384], sizes = [8, 64], strides = [1, 1]} : vector<8x768xbf16> to vector<8x64xbf16>
    %cst_25 = arith.constant dense<0.000000e+00> : vector<8x128xf32>
    %107 = tpu.matmul %106, %101, %cst_25 {dimension_numbers = #tpu.dot_dimension_numbers<[1], [0], [0], [1], [0, 0, 1, 1], [], []>} : vector<8x64xbf16>, vector<64x128xbf16>, vector<8x128xf32> -> vector<8x128xf32>
    %108 = vector.extract_strided_slice %15 {offsets = [0, 448], sizes = [8, 64], strides = [1, 1]} : vector<8x768xbf16> to vector<8x64xbf16>
    %cst_26 = arith.constant dense<0.000000e+00> : vector<8x128xf32>
    %109 = tpu.matmul %108, %101, %cst_26 {dimension_numbers = #tpu.dot_dimension_numbers<[1], [0], [0], [1], [0, 0, 1, 1], [], []>} : vector<8x64xbf16>, vector<64x128xbf16>, vector<8x128xf32> -> vector<8x128xf32>
    %110 = vector.extract_strided_slice %103 {offsets = [0, 0], sizes = [8, 64], strides = [1, 1]} : vector<8x128xf32> to vector<8x64xf32>
    %111 = vector.broadcast %98 : vector<1x64xf32> to vector<8x64xf32>
    %112 = arith.addf %110, %111 : vector<8x64xf32>
    %113 = vector.extract_strided_slice %105 {offsets = [0, 0], sizes = [8, 64], strides = [1, 1]} : vector<8x128xf32> to vector<8x64xf32>
    %114 = vector.broadcast %98 : vector<1x64xf32> to vector<8x64xf32>
    %115 = arith.addf %113, %114 : vector<8x64xf32>
    %116 = vector.extract_strided_slice %107 {offsets = [0, 0], sizes = [8, 64], strides = [1, 1]} : vector<8x128xf32> to vector<8x64xf32>
    %117 = vector.broadcast %98 : vector<1x64xf32> to vector<8x64xf32>
    %118 = arith.addf %116, %117 : vector<8x64xf32>
    %119 = vector.extract_strided_slice %103 {offsets = [0, 64], sizes = [8, 1], strides = [1, 1]} : vector<8x128xf32> to vector<8x1xf32>
    %120 = vector.broadcast %99 : vector<1x1xf32> to vector<8x1xf32>
    %121 = arith.addf %119, %120 : vector<8x1xf32>
    %122 = vector.extract_strided_slice %105 {offsets = [0, 64], sizes = [8, 1], strides = [1, 1]} : vector<8x128xf32> to vector<8x1xf32>
    %123 = vector.broadcast %99 : vector<1x1xf32> to vector<8x1xf32>
    %124 = arith.addf %122, %123 : vector<8x1xf32>
    %125 = vector.extract_strided_slice %107 {offsets = [0, 64], sizes = [8, 1], strides = [1, 1]} : vector<8x128xf32> to vector<8x1xf32>
    %126 = vector.broadcast %99 : vector<1x1xf32> to vector<8x1xf32>
    %127 = arith.addf %125, %126 : vector<8x1xf32>
    %128 = vector.extract_strided_slice %109 {offsets = [0, 65], sizes = [8, 1], strides = [1, 1]} : vector<8x128xf32> to vector<8x1xf32>
    %129 = vector.broadcast %100 : vector<1x1xf32> to vector<8x1xf32>
    %130 = arith.addf %128, %129 : vector<8x1xf32>
    %131 = arith.addf %130, %121 : vector<8x1xf32>
    %cst_27 = arith.constant 0.000000e+00 : f32
    %132 = vector.broadcast %cst_27 : f32 to vector<8x1xf32>
    %133 = arith.cmpf oge, %131, %132 : vector<8x1xf32>
    %cst_28 = arith.constant 1.000000e-01 : f32
    %134 = vector.broadcast %cst_28 : f32 to vector<8x1xf32>
    %135 = arith.mulf %134, %131 : vector<8x1xf32>
    %136 = arith.select %133, %131, %135 : vector<8x1xi1>, vector<8x1xf32>
    %137 = arith.addf %130, %124 : vector<8x1xf32>
    %cst_29 = arith.constant 0.000000e+00 : f32
    %138 = vector.broadcast %cst_29 : f32 to vector<8x1xf32>
    %139 = arith.cmpf oge, %137, %138 : vector<8x1xf32>
    %cst_30 = arith.constant 1.000000e-01 : f32
    %140 = vector.broadcast %cst_30 : f32 to vector<8x1xf32>
    %141 = arith.mulf %140, %137 : vector<8x1xf32>
    %142 = arith.select %139, %137, %141 : vector<8x1xi1>, vector<8x1xf32>
    %143 = arith.addf %130, %127 : vector<8x1xf32>
    %cst_31 = arith.constant 0.000000e+00 : f32
    %144 = vector.broadcast %cst_31 : f32 to vector<8x1xf32>
    %145 = arith.cmpf oge, %143, %144 : vector<8x1xf32>
    %cst_32 = arith.constant 1.000000e-01 : f32
    %146 = vector.broadcast %cst_32 : f32 to vector<8x1xf32>
    %147 = arith.mulf %146, %143 : vector<8x1xf32>
    %148 = arith.select %145, %143, %147 : vector<8x1xi1>, vector<8x1xf32>
    %149 = arith.maximumf %136, %142 : vector<8x1xf32>
    %150 = arith.maximumf %149, %148 : vector<8x1xf32>
    %151 = arith.subf %136, %150 : vector<8x1xf32>
    %152 = math.exp %151 : vector<8x1xf32>
    %153 = arith.subf %142, %150 : vector<8x1xf32>
    %154 = math.exp %153 : vector<8x1xf32>
    %155 = arith.subf %148, %150 : vector<8x1xf32>
    %156 = math.exp %155 : vector<8x1xf32>
    %157 = arith.addf %152, %154 : vector<8x1xf32>
    %158 = arith.addf %157, %156 : vector<8x1xf32>
    %159 = tpu.reciprocal %158 {approx = true} : vector<8x1xf32> -> vector<8x1xf32>
    %160 = vector.broadcast %152 : vector<8x1xf32> to vector<8x64xf32>
    %161 = arith.mulf %160, %112 : vector<8x64xf32>
    %162 = vector.broadcast %154 : vector<8x1xf32> to vector<8x64xf32>
    %163 = arith.mulf %162, %115 : vector<8x64xf32>
    %164 = arith.addf %161, %163 : vector<8x64xf32>
    %165 = vector.broadcast %156 : vector<8x1xf32> to vector<8x64xf32>
    %166 = arith.mulf %165, %118 : vector<8x64xf32>
    %167 = arith.addf %164, %166 : vector<8x64xf32>
    %168 = vector.broadcast %159 : vector<8x1xf32> to vector<8x64xf32>
    %169 = arith.mulf %167, %168 : vector<8x64xf32>
    %170 = arith.truncf %169 : vector<8x64xf32> to vector<8x64xbf16>
    %c64 = arith.constant 64 : index
    %c0_33 = arith.constant 0 : index
    %171 = vector.load %arg3[%c64, %c0_33] : memref<200x256xbf16, #tpu.memory_space<vmem>>, vector<64x256xbf16>
    %cst_34 = arith.constant dense<0.000000e+00> : vector<8x256xf32>
    %172 = tpu.matmul %170, %171, %cst_34 {dimension_numbers = #tpu.dot_dimension_numbers<[1], [0], [0], [1], [0, 0, 1, 1], [], []>} : vector<8x64xbf16>, vector<64x256xbf16>, vector<8x256xf32> -> vector<8x256xf32>
    %173 = arith.addf %96, %172 : vector<8x256xf32>
    %174 = vector.extract_strided_slice %4 {offsets = [3, 0], sizes = [1, 768], strides = [1, 1]} : vector<6x768xf32> to vector<1x768xf32>
    %175 = vector.extract_strided_slice %174 {offsets = [0, 0], sizes = [1, 64], strides = [1, 1]} : vector<1x768xf32> to vector<1x64xf32>
    %176 = vector.extract_strided_slice %174 {offsets = [0, 64], sizes = [1, 1], strides = [1, 1]} : vector<1x768xf32> to vector<1x1xf32>
    %177 = vector.extract_strided_slice %174 {offsets = [0, 65], sizes = [1, 1], strides = [1, 1]} : vector<1x768xf32> to vector<1x1xf32>
    %c0_35 = arith.constant 0 : index
    %c256 = arith.constant 256 : index
    %178 = vector.load %arg2[%c0_35, %c256] : memref<64x384xbf16, #tpu.memory_space<vmem>>, vector<64x128xbf16>
    %179 = vector.extract_strided_slice %15 {offsets = [0, 512], sizes = [8, 64], strides = [1, 1]} : vector<8x768xbf16> to vector<8x64xbf16>
    %cst_36 = arith.constant dense<0.000000e+00> : vector<8x128xf32>
    %180 = tpu.matmul %179, %178, %cst_36 {dimension_numbers = #tpu.dot_dimension_numbers<[1], [0], [0], [1], [0, 0, 1, 1], [], []>} : vector<8x64xbf16>, vector<64x128xbf16>, vector<8x128xf32> -> vector<8x128xf32>
    %181 = vector.extract_strided_slice %15 {offsets = [0, 576], sizes = [8, 64], strides = [1, 1]} : vector<8x768xbf16> to vector<8x64xbf16>
    %cst_37 = arith.constant dense<0.000000e+00> : vector<8x128xf32>
    %182 = tpu.matmul %181, %178, %cst_37 {dimension_numbers = #tpu.dot_dimension_numbers<[1], [0], [0], [1], [0, 0, 1, 1], [], []>} : vector<8x64xbf16>, vector<64x128xbf16>, vector<8x128xf32> -> vector<8x128xf32>
    %183 = vector.extract_strided_slice %15 {offsets = [0, 640], sizes = [8, 64], strides = [1, 1]} : vector<8x768xbf16> to vector<8x64xbf16>
    %cst_38 = arith.constant dense<0.000000e+00> : vector<8x128xf32>
    %184 = tpu.matmul %183, %178, %cst_38 {dimension_numbers = #tpu.dot_dimension_numbers<[1], [0], [0], [1], [0, 0, 1, 1], [], []>} : vector<8x64xbf16>, vector<64x128xbf16>, vector<8x128xf32> -> vector<8x128xf32>
    %185 = vector.extract_strided_slice %15 {offsets = [0, 704], sizes = [8, 64], strides = [1, 1]} : vector<8x768xbf16> to vector<8x64xbf16>
    %cst_39 = arith.constant dense<0.000000e+00> : vector<8x128xf32>
    %186 = tpu.matmul %185, %178, %cst_39 {dimension_numbers = #tpu.dot_dimension_numbers<[1], [0], [0], [1], [0, 0, 1, 1], [], []>} : vector<8x64xbf16>, vector<64x128xbf16>, vector<8x128xf32> -> vector<8x128xf32>
    %187 = vector.extract_strided_slice %180 {offsets = [0, 0], sizes = [8, 64], strides = [1, 1]} : vector<8x128xf32> to vector<8x64xf32>
    %188 = vector.broadcast %175 : vector<1x64xf32> to vector<8x64xf32>
    %189 = arith.addf %187, %188 : vector<8x64xf32>
    %190 = vector.extract_strided_slice %182 {offsets = [0, 0], sizes = [8, 64], strides = [1, 1]} : vector<8x128xf32> to vector<8x64xf32>
    %191 = vector.broadcast %175 : vector<1x64xf32> to vector<8x64xf32>
    %192 = arith.addf %190, %191 : vector<8x64xf32>
    %193 = vector.extract_strided_slice %184 {offsets = [0, 0], sizes = [8, 64], strides = [1, 1]} : vector<8x128xf32> to vector<8x64xf32>
    %194 = vector.broadcast %175 : vector<1x64xf32> to vector<8x64xf32>
    %195 = arith.addf %193, %194 : vector<8x64xf32>
    %196 = vector.extract_strided_slice %180 {offsets = [0, 64], sizes = [8, 1], strides = [1, 1]} : vector<8x128xf32> to vector<8x1xf32>
    %197 = vector.broadcast %176 : vector<1x1xf32> to vector<8x1xf32>
    %198 = arith.addf %196, %197 : vector<8x1xf32>
    %199 = vector.extract_strided_slice %182 {offsets = [0, 64], sizes = [8, 1], strides = [1, 1]} : vector<8x128xf32> to vector<8x1xf32>
    %200 = vector.broadcast %176 : vector<1x1xf32> to vector<8x1xf32>
    %201 = arith.addf %199, %200 : vector<8x1xf32>
    %202 = vector.extract_strided_slice %184 {offsets = [0, 64], sizes = [8, 1], strides = [1, 1]} : vector<8x128xf32> to vector<8x1xf32>
    %203 = vector.broadcast %176 : vector<1x1xf32> to vector<8x1xf32>
    %204 = arith.addf %202, %203 : vector<8x1xf32>
    %205 = vector.extract_strided_slice %186 {offsets = [0, 65], sizes = [8, 1], strides = [1, 1]} : vector<8x128xf32> to vector<8x1xf32>
    %206 = vector.broadcast %177 : vector<1x1xf32> to vector<8x1xf32>
    %207 = arith.addf %205, %206 : vector<8x1xf32>
    %208 = arith.addf %207, %198 : vector<8x1xf32>
    %cst_40 = arith.constant 0.000000e+00 : f32
    %209 = vector.broadcast %cst_40 : f32 to vector<8x1xf32>
    %210 = arith.cmpf oge, %208, %209 : vector<8x1xf32>
    %cst_41 = arith.constant 1.000000e-01 : f32
    %211 = vector.broadcast %cst_41 : f32 to vector<8x1xf32>
    %212 = arith.mulf %211, %208 : vector<8x1xf32>
    %213 = arith.select %210, %208, %212 : vector<8x1xi1>, vector<8x1xf32>
    %214 = arith.addf %207, %201 : vector<8x1xf32>
    %cst_42 = arith.constant 0.000000e+00 : f32
    %215 = vector.broadcast %cst_42 : f32 to vector<8x1xf32>
    %216 = arith.cmpf oge, %214, %215 : vector<8x1xf32>
    %cst_43 = arith.constant 1.000000e-01 : f32
    %217 = vector.broadcast %cst_43 : f32 to vector<8x1xf32>
    %218 = arith.mulf %217, %214 : vector<8x1xf32>
    %219 = arith.select %216, %214, %218 : vector<8x1xi1>, vector<8x1xf32>
    %220 = arith.addf %207, %204 : vector<8x1xf32>
    %cst_44 = arith.constant 0.000000e+00 : f32
    %221 = vector.broadcast %cst_44 : f32 to vector<8x1xf32>
    %222 = arith.cmpf oge, %220, %221 : vector<8x1xf32>
    %cst_45 = arith.constant 1.000000e-01 : f32
    %223 = vector.broadcast %cst_45 : f32 to vector<8x1xf32>
    %224 = arith.mulf %223, %220 : vector<8x1xf32>
    %225 = arith.select %222, %220, %224 : vector<8x1xi1>, vector<8x1xf32>
    %226 = arith.maximumf %213, %219 : vector<8x1xf32>
    %227 = arith.maximumf %226, %225 : vector<8x1xf32>
    %228 = arith.subf %213, %227 : vector<8x1xf32>
    %229 = math.exp %228 : vector<8x1xf32>
    %230 = arith.subf %219, %227 : vector<8x1xf32>
    %231 = math.exp %230 : vector<8x1xf32>
    %232 = arith.subf %225, %227 : vector<8x1xf32>
    %233 = math.exp %232 : vector<8x1xf32>
    %234 = arith.addf %229, %231 : vector<8x1xf32>
    %235 = arith.addf %234, %233 : vector<8x1xf32>
    %236 = tpu.reciprocal %235 {approx = true} : vector<8x1xf32> -> vector<8x1xf32>
    %237 = vector.broadcast %229 : vector<8x1xf32> to vector<8x64xf32>
    %238 = arith.mulf %237, %189 : vector<8x64xf32>
    %239 = vector.broadcast %231 : vector<8x1xf32> to vector<8x64xf32>
    %240 = arith.mulf %239, %192 : vector<8x64xf32>
    %241 = arith.addf %238, %240 : vector<8x64xf32>
    %242 = vector.broadcast %233 : vector<8x1xf32> to vector<8x64xf32>
    %243 = arith.mulf %242, %195 : vector<8x64xf32>
    %244 = arith.addf %241, %243 : vector<8x64xf32>
    %245 = vector.broadcast %236 : vector<8x1xf32> to vector<8x64xf32>
    %246 = arith.mulf %244, %245 : vector<8x64xf32>
    %247 = arith.truncf %246 : vector<8x64xf32> to vector<8x64xbf16>
    %c128_46 = arith.constant 128 : index
    %c0_47 = arith.constant 0 : index
    %248 = vector.load %arg3[%c128_46, %c0_47] : memref<200x256xbf16, #tpu.memory_space<vmem>>, vector<64x256xbf16>
    %cst_48 = arith.constant dense<0.000000e+00> : vector<8x256xf32>
    %249 = tpu.matmul %247, %248, %cst_48 {dimension_numbers = #tpu.dot_dimension_numbers<[1], [0], [0], [1], [0, 0, 1, 1], [], []>} : vector<8x64xbf16>, vector<64x256xbf16>, vector<8x256xf32> -> vector<8x256xf32>
    %250 = arith.addf %173, %249 : vector<8x256xf32>
    %cst_49 = arith.constant 0.000000e+00 : f32
    %251 = vector.broadcast %cst_49 : f32 to vector<8x256xf32>
    %252 = arith.maximumf %250, %251 : vector<8x256xf32>
    %c0_50 = arith.constant 0 : index
    %c0_51 = arith.constant 0 : index
    %253 = vector.load %arg4[%c0_50, %c0_51] : memref<256x4xf32, #tpu.memory_space<vmem>>, vector<256x4xf32>
    %cst_52 = arith.constant dense<0.000000e+00> : vector<8x4xf32>
    %254 = tpu.matmul %252, %253, %cst_52 {dimension_numbers = #tpu.dot_dimension_numbers<[1], [0], [0], [1], [0, 0, 1, 1], [], []>} : vector<8x256xf32>, vector<256x4xf32>, vector<8x4xf32> -> vector<8x4xf32>
    %255 = vector.broadcast %7 : vector<1x4xf32> to vector<8x4xf32>
    %256 = arith.addf %254, %255 : vector<8x4xf32>
    %257 = math.tanh %256 : vector<8x4xf32>
    %c0_53 = arith.constant 0 : index
    %c0_54 = arith.constant 0 : index
    %258 = vector.load %arg5[%c0_53, %c0_54] : memref<8x4xf32, #tpu.memory_space<vmem>>, vector<8x4xf32>
    tpu.vector_store %arg5[%c0_53, %c0_54], %257 {strides = array<i32>} : memref<8x4xf32, #tpu.memory_space<vmem>>, vector<8x4xf32>,
    return
  }
}

</mosaic_0001>

<llo_original>
// kernel: tpu_custom_call.1
$region0: #{tpu_custom_call.1}
  #allocation0 [shape = 'u32[]', space=smem, size = 0x4, offset = 0x4, fixed_abs, tag = 'smem constant byte address 0x4 - core index']
  #allocation1 [shape = 'u32[72,128]{1,0:T(1,128)}', space=vmem, size = 0x9000, scoped, tag = 'internal scratch']
  %s0 = inlined_call_operand.hbm [shape: f32[8,75], index: 0, kind: input, shape index: {}]
  %s1 = inlined_call_operand.vmem [shape: bf16[81,768], index: 1, kind: input, shape index: {}]
  %s2 = inlined_call_operand.hbm [shape: bf16[64,384], index: 2, kind: input, shape index: {}]
  %s3 = inlined_call_operand.hbm [shape: bf16[200,256], index: 3, kind: input, shape index: {}]
  %s4 = inlined_call_operand.vmem [shape: f32[256,4], index: 4, kind: input, shape index: {}]
  %s5 = inlined_call_operand.vmem [shape: f32[8,4], index: 5, kind: output, shape index: {}]
  %s6 = sld [smem:[#allocation0]]
  $region42: #{tpu_custom_call.1} parent=0
    _
  %s8 = ssub.s32 1, %s6
  %s9 = scalar_select 0, %s8, %s6
  $region1: #{tpu_custom_call.1} parent=0
    #allocation2 [shape = 'u8[4096]{0}', space=vmem, size = 0x1000, scoped, tag = 'input window, operand 0, single buffered']
    #allocation3 [shape = 's32[1]{0}', space=sflag, size = 0x4, scoped, tag = 'scoped memory for tpu_custom_call.1']
    #allocation4 [shape = 'u8[49152]{0}', space=vmem, size = 0xc000, scoped, tag = 'input window, operand 2, single buffered']
    #allocation5 [shape = 's32[1]{0}', space=sflag, size = 0x4, scoped, tag = 'scoped memory for tpu_custom_call.1']
    #allocation6 [shape = 'u8[102400]{0}', space=vmem, size = 0x19000, scoped, tag = 'input window, operand 3, single buffered']
    %10 = vsyncpa [#allocation3], 0
    %11 = vsyncpa [#allocation5], 0
    // Predicated region
    $region2: #{tpu_custom_call.1} parent=1 // pred_check
      _
    $region3: #{tpu_custom_call.1} parent=1 // pred_check_branch
      %13 = sbr.rel (0) target = $region5
    $region4: #{tpu_custom_call.1} parent=1 // pred_region
      %15 = vsyncadd [#allocation3], 0
      %s17 = sshll.u32 %s0, 4
      %s18 = int_to_ptr.hbm [resolvable:$true] %s17
      %s19 = sshll.u32 [#allocation2], 4
      %s20 = int_to_ptr.vmem [resolvable:$true] %s19
      %22 = dma.hbm_to_vmem [thread:$0]  %s18, 128, %s20, [#allocation3]
    $region5: #{tpu_custom_call.1} parent=1 // pred_fallthru
      _
    // Predicated region
    $region6: #{tpu_custom_call.1} parent=1 // pred_check
      _
    $region7: #{tpu_custom_call.1} parent=1 // pred_check_branch
      %24 = sbr.rel (0) target = $region9
    $region8: #{tpu_custom_call.1} parent=1 // pred_region
      _
    $region9: #{tpu_custom_call.1} parent=1 // pred_fallthru
      _
    // Predicated region
    $region10: #{tpu_custom_call.1} parent=1 // pred_check
      _
    $region11: #{tpu_custom_call.1} parent=1 // pred_check_branch
      %26 = sbr.rel (0) target = $region13
    $region12: #{tpu_custom_call.1} parent=1 // pred_region
      %28 = vsyncadd [#allocation5], 0
      %s29 = sshll.u32 %s2, 4
      %s30 = int_to_ptr.hbm [resolvable:$true] %s29
      %s31 = sshll.u32 [#allocation4], 4
      %s32 = int_to_ptr.vmem [resolvable:$true] %s31
      %37 = dma.hbm_to_vmem [thread:$0]  %s30, 1536, %s32, [#allocation5], 192, 192, 12
    $region13: #{tpu_custom_call.1} parent=1 // pred_fallthru
      _
    // Predicated region
    $region14: #{tpu_custom_call.1} parent=1 // pred_check
      _
    $region15: #{tpu_custom_call.1} parent=1 // pred_check_branch
      %39 = sbr.rel (0) target = $region17
    $region16: #{tpu_custom_call.1} parent=1 // pred_region
      %41 = vsyncadd [#allocation5], 0
      %s42 = sshll.u32 %s3, 4
      %s43 = int_to_ptr.hbm [resolvable:$true] %s42
      %s44 = sshll.u32 [#allocation6], 4
      %s45 = int_to_ptr.vmem [resolvable:$true] %s44
      %50 = dma.hbm_to_vmem [thread:$0]  %s43, 3200, %s45, [#allocation5], 128, 128, 8
    $region17: #{tpu_custom_call.1} parent=1 // pred_fallthru
      _
    // Predicated region
    $region18: #{tpu_custom_call.1} parent=1 // pred_check
      _
    $region19: #{tpu_custom_call.1} parent=1 // pred_check_branch
      %52 = sbr.rel (0) target = $region21
    $region20: #{tpu_custom_call.1} parent=1 // pred_region
      _
    $region21: #{tpu_custom_call.1} parent=1 // pred_fallthru
      _
    // Predicated region
    $region22: #{tpu_custom_call.1} parent=1 // pred_check
      _
    $region23: #{tpu_custom_call.1} parent=1 // pred_check_branch
      %54 = sbr.rel (0) target = $region25
    $region24: #{tpu_custom_call.1} parent=1 // pred_region
      %56 = dma.done [#allocation3], 128
    $region25: #{tpu_custom_call.1} parent=1 // pred_fallthru
      _
    // Predicated region
    $region26: #{tpu_custom_call.1} parent=1 // pred_check
      _
    $region27: #{tpu_custom_call.1} parent=1 // pred_check_branch
      %58 = sbr.rel (0) target = $region29
    $region28: #{tpu_custom_call.1} parent=1 // pred_region
      %60 = dma.done [#allocation5], 1536
    $region29: #{tpu_custom_call.1} parent=1 // pred_fallthru
      _
    // Predicated region
    $region30: #{tpu_custom_call.1} parent=1 // pred_check
      _
    $region31: #{tpu_custom_call.1} parent=1 // pred_check_branch
      %62 = sbr.rel (0) target = $region33
    $region32: #{tpu_custom_call.1} parent=1 // pred_region
      %64 = dma.done [#allocation5], 3200
    $region33: #{tpu_custom_call.1} parent=1 // pred_fallthru
      _
    %v66 = vld [vmem:[#allocation2] sm:$0xff]
    %v67 = vpack.c.bf16 %v66, %v66
    %v68 = vld [vmem:[%s1 + $0xd8] sm:$0xee]
    %v69 = vld [vmem:[%s1 + $0xe0] sm:$0xee]
    %v70 = vld [vmem:[%s1 + $0xe8] sm:$0xee]
    %v71 = vld [vmem:[%s1 + $0xf0] sm:$0x11]
    %v72 = vunpack.c.l.bf16 %v68
    %v73 = vunpack.c.h.bf16 %v68
    %v74 = vunpack.c.l.bf16 %v69
    %v75 = vunpack.c.h.bf16 %v69
    %v76 = vunpack.c.l.bf16 %v70
    %v77 = vunpack.c.h.bf16 %v70
    %v78 = vunpack.c.l.bf16 %v71
    %v79 = vld [vmem:[%s1] sm:$0xff]
    %v80 = vld [vmem:[%s1 + $0x8] sm:$0xff]
    %v81 = vld [vmem:[%s1 + $0x10] sm:$0xff]
    %v82 = vld [vmem:[%s1 + $0x18] sm:$0xff]
    %v83 = vld [vmem:[%s1 + $0x20] sm:$0xff]
    %v84 = vld [vmem:[%s1 + $0x28] sm:$0xff]
    %v85 = vld [vmem:[%s1 + $0x30] sm:$0xff]
    %v86 = vld [vmem:[%s1 + $0x38] sm:$0xff]
    %v87 = vld [vmem:[%s1 + $0x40] sm:$0xff]
    %v88 = vld [vmem:[%s1 + $0x48] sm:$0xff]
    %v89 = vld [vmem:[%s1 + $0x50] sm:$0xff]
    %v90 = vld [vmem:[%s1 + $0x58] sm:$0xff]
    %v91 = vld [vmem:[%s1 + $0x60] sm:$0xff]
    %v92 = vld [vmem:[%s1 + $0x68] sm:$0xff]
    %v93 = vld [vmem:[%s1 + $0x70] sm:$0xff]
    %v94 = vld [vmem:[%s1 + $0x78] sm:$0xff]
    %v95 = vld [vmem:[%s1 + $0x80] sm:$0xff]
    %v96 = vld [vmem:[%s1 + $0x88] sm:$0xff]
    %v97 = vld [vmem:[%s1 + $0x90] sm:$0xff]
    %v98 = vld [vmem:[%s1 + $0x98] sm:$0xff]
    %v99 = vld [vmem:[%s1 + $0xa0] sm:$0xff]
    %v100 = vld [vmem:[%s1 + $0xa8] sm:$0xff]
    %v101 = vld [vmem:[%s1 + $0xb0] sm:$0xff]
    %v102 = vld [vmem:[%s1 + $0xb8] sm:$0xff]
    %v103 = vld [vmem:[%s1 + $0xc0] sm:$0xff]
    %v104 = vld [vmem:[%s1 + $0xc8] sm:$0xff]
    %v105 = vld [vmem:[%s1 + $0xd0] sm:$0xff]
    %v106 = vld [vmem:[%s1 + $0xd8] sm:$0x33]
    %v107 = vld [vmem:[%s1 + $0xe0] sm:$0x33]
    %v108 = vld [vmem:[%s1 + $0xe8] sm:$0x33]
    %v109 = vperm.slane %v72, 3
    %v110 = vperm.slane %v73, 3
    %v111 = vperm.slane %v74, 3
    %v112 = vperm.slane %v75, 3
    %v113 = vperm.slane %v76, 3
    %v114 = vperm.slane %v77, 3
    %v145 = vunpack.c.l.b16 %v79
    %v146 = vunpack.c.h.b16 %v79
    %v147 = vunpack.c.l.b16 %v80
    %v148 = vunpack.c.h.b16 %v80
    %v149 = vunpack.c.l.b16 %v81
    %v150 = vunpack.c.h.b16 %v81
    %v151 = vunpack.c.l.b16 %v82
    %v152 = vunpack.c.h.b16 %v82
    %v153 = vunpack.c.l.b16 %v83
    %v154 = vunpack.c.h.b16 %v83
    %v155 = vunpack.c.l.b16 %v84
    %v156 = vunpack.c.h.b16 %v84
    %v157 = vunpack.c.l.b16 %v85
    %v158 = vunpack.c.h.b16 %v85
    %v159 = vunpack.c.l.b16 %v86
    %v160 = vunpack.c.h.b16 %v86
    %v161 = vunpack.c.l.b16 %v87
    %v162 = vunpack.c.h.b16 %v87
    %v163 = vunpack.c.l.b16 %v88
    %v164 = vunpack.c.h.b16 %v88
    %v165 = vunpack.c.l.b16 %v89
    %v166 = vunpack.c.h.b16 %v89
    %v167 = vunpack.c.l.b16 %v90
    %v168 = vunpack.c.h.b16 %v90
    %v169 = vunpack.c.l.b16 %v91
    %v170 = vunpack.c.h.b16 %v91
    %v171 = vunpack.c.l.b16 %v92
    %v172 = vunpack.c.h.b16 %v92
    %v173 = vunpack.c.l.b16 %v93
    %v174 = vunpack.c.h.b16 %v93
    %v175 = vunpack.c.l.b16 %v94
    %v176 = vunpack.c.h.b16 %v94
    %v177 = vunpack.c.l.b16 %v95
    %v178 = vunpack.c.h.b16 %v95
    %v179 = vunpack.c.l.b16 %v96
    %v180 = vunpack.c.h.b16 %v96
    %v181 = vunpack.c.l.b16 %v97
    %v182 = vunpack.c.h.b16 %v97
    %v183 = vunpack.c.l.b16 %v98
    %v184 = vunpack.c.h.b16 %v98
    %v185 = vunpack.c.l.b16 %v99
    %v186 = vunpack.c.h.b16 %v99
    %v187 = vunpack.c.l.b16 %v100
    %v188 = vunpack.c.h.b16 %v100
    %v189 = vunpack.c.l.b16 %v101
    %v190 = vunpack.c.h.b16 %v101
    %v191 = vunpack.c.l.b16 %v102
    %v192 = vunpack.c.h.b16 %v102
    %v193 = vunpack.c.l.b16 %v103
    %v194 = vunpack.c.h.b16 %v103
    %v195 = vunpack.c.l.b16 %v104
    %v196 = vunpack.c.h.b16 %v104
    %v197 = vunpack.c.l.b16 %v105
    %v198 = vunpack.c.h.b16 %v105
    %v199 = vunpack.c.l.b16 %v106
    %v200 = vunpack.c.h.b16 %v106
    %v201 = vunpack.c.l.b16 %v107
    %v202 = vunpack.c.h.b16 %v107
    %v203 = vunpack.c.l.b16 %v108
    %v204 = vunpack.c.h.b16 %v108
    %v205 = vpack.c.b16 %v151, %v145
    %v206 = vpack.c.b16 %v152, %v146
    %v207 = vpack.c.b16 %v153, %v147
    %v208 = vpack.c.b16 %v154, %v148
    %v209 = vpack.c.b16 %v155, %v149
    %v210 = vpack.c.b16 %v156, %v150
    %v211 = vpack.c.b16 %v163, %v157
    %v212 = vpack.c.b16 %v164, %v158
    %v213 = vpack.c.b16 %v165, %v159
    %v214 = vpack.c.b16 %v166, %v160
    %v215 = vpack.c.b16 %v167, %v161
    %v216 = vpack.c.b16 %v168, %v162
    %v217 = vpack.c.b16 %v175, %v169
    %v218 = vpack.c.b16 %v176, %v170
    %v219 = vpack.c.b16 %v177, %v171
    %v220 = vpack.c.b16 %v178, %v172
    %v221 = vpack.c.b16 %v179, %v173
    %v222 = vpack.c.b16 %v180, %v174
    %v223 = vpack.c.b16 %v187, %v181
    %v224 = vpack.c.b16 %v188, %v182
    %v225 = vpack.c.b16 %v189, %v183
    %v226 = vpack.c.b16 %v190, %v184
    %v227 = vpack.c.b16 %v191, %v185
    %v228 = vpack.c.b16 %v192, %v186
    %v229 = vpack.c.b16 %v199, %v193
    %v230 = vpack.c.b16 %v200, %v194
    %v231 = vpack.c.b16 %v201, %v195
    %v232 = vpack.c.b16 %v202, %v196
    %v233 = vpack.c.b16 %v203, %v197
    %v234 = vpack.c.b16 %v204, %v198
    %vm259 = vcmask 613376
    %v261 = vsel %vm259, %v67, 0
    %vm263 = vcmask 1044480
    %vm264 = vcmask 1045504
    %v265 = vsel %vm263, 4294967295, 65535
    %v266 = vsel %vm264, %v265, 0
    %v268 = vand.u32 %v229, %v266
    %v271 = vand.u32 %v230, %v266
    %v274 = vand.u32 %v231, %v266
    %v277 = vand.u32 %v232, %v266
    %v280 = vand.u32 %v233, %v266
    %v283 = vand.u32 %v234, %v266
    %285 = vmatpush.bf16.msra.mxu0 0
    %286 = vmatpush.bf16.msra.mxu0 0
    %287 = vmatpush.bf16.msra.mxu0 0
    %288 = vmatpush.bf16.msra.mxu0 %v268
    %289 = vmatpush.bf16.msra.mxu0 %v223
    %290 = vmatpush.bf16.msra.mxu0 %v217
    %291 = vmatpush.bf16.msra.mxu0 %v211
    %292 = vmatpush.bf16.msra.mxu0 %v205
    %293 = vmatmul.bf16.gmra.mxu0 %v261
    %v294 = vpop.f32.mrf.mxu0
    %v295 = vadd.f32 %v109, %v294
    %v296 = vpop.f32.mrf.mxu0
    %297 = vdwg.mxu0
    %298 = vmatpush.bf16.msra.mxu0 0
    %299 = vmatpush.bf16.msra.mxu0 0
    %300 = vmatpush.bf16.msra.mxu0 0
    %301 = vmatpush.bf16.msra.mxu0 %v271
    %302 = vmatpush.bf16.msra.mxu0 %v224
    %303 = vmatpush.bf16.msra.mxu0 %v218
    %304 = vmatpush.bf16.msra.mxu0 %v212
    %305 = vmatpush.bf16.msra.mxu0 %v206
    %306 = vmatmul.bf16.gmra.mxu0 %v261
    %v307 = vpop.f32.mrf.mxu0
    %v308 = vadd.f32 %v110, %v307
    %v309 = vpop.f32.mrf.mxu0
    %310 = vdwg.mxu0
    %311 = vmatpush.bf16.msra.mxu0 0
    %312 = vmatpush.bf16.msra.mxu0 0
    %313 = vmatpush.bf16.msra.mxu0 0
    %314 = vmatpush.bf16.msra.mxu0 %v274
    %315 = vmatpush.bf16.msra.mxu0 %v225
    %316 = vmatpush.bf16.msra.mxu0 %v219
    %317 = vmatpush.bf16.msra.mxu0 %v213
    %318 = vmatpush.bf16.msra.mxu0 %v207
    %319 = vmatmul.bf16.gmra.mxu0 %v261
    %v320 = vpop.f32.mrf.mxu0
    %v321 = vadd.f32 %v111, %v320
    %v322 = vpop.f32.mrf.mxu0
    %323 = vdwg.mxu0
    %324 = vmatpush.bf16.msra.mxu0 0
    %325 = vmatpush.bf16.msra.mxu0 0
    %326 = vmatpush.bf16.msra.mxu0 0
    %327 = vmatpush.bf16.msra.mxu0 %v277
    %328 = vmatpush.bf16.msra.mxu0 %v226
    %329 = vmatpush.bf16.msra.mxu0 %v220
    %330 = vmatpush.bf16.msra.mxu0 %v214
    %331 = vmatpush.bf16.msra.mxu0 %v208
    %332 = vmatmul.bf16.gmra.mxu0 %v261
    %v333 = vpop.f32.mrf.mxu0
    %v334 = vadd.f32 %v112, %v333
    %v335 = vpop.f32.mrf.mxu0
    %336 = vdwg.mxu0
    %337 = vmatpush.bf16.msra.mxu0 0
    %338 = vmatpush.bf16.msra.mxu0 0
    %339 = vmatpush.bf16.msra.mxu0 0
    %340 = vmatpush.bf16.msra.mxu0 %v280
    %341 = vmatpush.bf16.msra.mxu0 %v227
    %342 = vmatpush.bf16.msra.mxu0 %v221
    %343 = vmatpush.bf16.msra.mxu0 %v215
    %344 = vmatpush.bf16.msra.mxu0 %v209
    %345 = vmatmul.bf16.gmra.mxu0 %v261
    %v346 = vpop.f32.mrf.mxu0
    %v347 = vadd.f32 %v113, %v346
    %v348 = vpop.f32.mrf.mxu0
    %349 = vdwg.mxu0
    %350 = vmatpush.bf16.msra.mxu0 0
    %351 = vmatpush.bf16.msra.mxu0 0
    %352 = vmatpush.bf16.msra.mxu0 0
    %353 = vmatpush.bf16.msra.mxu0 %v283
    %354 = vmatpush.bf16.msra.mxu0 %v228
    %355 = vmatpush.bf16.msra.mxu0 %v222
    %356 = vmatpush.bf16.msra.mxu0 %v216
    %357 = vmatpush.bf16.msra.mxu0 %v210
    %358 = vmatmul.bf16.gmra.mxu0 %v261
    %v359 = vpop.f32.mrf.mxu0
    %v360 = vadd.f32 %v114, %v359
    %v361 = vpop.f32.mrf.mxu0
    %362 = vdwg.mxu0
    %v363 = vmax.f32 %v295, 0.0
    %v364 = vmax.f32 %v308, 0.0
    %v365 = vmax.f32 %v321, 0.0
    %v366 = vmax.f32 %v334, 0.0
    %v367 = vmax.f32 %v347, 0.0
    %v368 = vmax.f32 %v360, 0.0
    %v369 = vpack.c.bf16 %v364, %v363
    %v370 = vpack.c.bf16 %v366, %v365
    %v371 = vpack.c.bf16 %v368, %v367
    %v372 = vld [vmem:[#allocation6 + $0xc0] sm:$0x77]
    %v373 = vperm.slane %v72, 7
    %v374 = vperm.slane %v73, 7
    %376 = vrot.lane.b32.xlu0 %v67, 59
    %v377 = vpop.permute.xlu0 %376
    %v379 = vunpack.c.l.b16 %v372
    %v380 = vunpack.c.h.b16 %v372
    %v381 = vpack.c.b16 %v379, %v379
    %v382 = vpack.c.b16 %v380, %v380
    %vm383 = vcmask 48128
    %v385 = vsel %vm383, %v377, 0
    %vm387 = vcmask 1042432
    %v389 = vsel %vm387, %v381, 0
    %v392 = vsel %vm387, %v382, 0
    %394 = vmatpush.bf16.msra.mxu0 0
    %395 = vmatpush.bf16.msra.mxu0 0
    %396 = vmatpush.bf16.msra.mxu0 0
    %397 = vmatpush.bf16.msra.mxu0 0
    %398 = vmatpush.bf16.msra.mxu0 0
    %399 = vmatpush.bf16.msra.mxu0 0
    %400 = vmatpush.bf16.msra.mxu0 0
    %401 = vmatpush.bf16.msra.mxu0 %v389
    %402 = vmatmul.bf16.gmra.mxu0 %v385
    %v403 = vpop.f32.mrf.mxu0
    %v404 = vadd.f32 %v373, %v403
    %v405 = vpop.f32.mrf.mxu0
    %406 = vdwg.mxu0
    %407 = vmatpush.bf16.msra.mxu0 0
    %408 = vmatpush.bf16.msra.mxu0 0
    %409 = vmatpush.bf16.msra.mxu0 0
    %410 = vmatpush.bf16.msra.mxu0 0
    %411 = vmatpush.bf16.msra.mxu0 0
    %412 = vmatpush.bf16.msra.mxu0 0
    %413 = vmatpush.bf16.msra.mxu0 0
    %414 = vmatpush.bf16.msra.mxu0 %v392
    %415 = vmatmul.bf16.gmra.mxu0 %v385
    %v416 = vpop.f32.mrf.mxu0
    %v417 = vadd.f32 %v374, %v416
    %v418 = vpop.f32.mrf.mxu0
    %419 = vdwg.mxu0
    %v420 = vld [vmem:[#allocation4] sm:$0xf]
    %v421 = vld [vmem:[#allocation4 + $0xc] sm:$0xf]
    %v422 = vld [vmem:[#allocation4 + $0x18] sm:$0xf]
    %v423 = vld [vmem:[#allocation4 + $0x24] sm:$0xf]
    %v424 = vld [vmem:[#allocation4 + $0x30] sm:$0xf]
    %v425 = vld [vmem:[#allocation4 + $0x3c] sm:$0xf]
    %v426 = vld [vmem:[#allocation4 + $0x48] sm:$0xf]
    %v427 = vld [vmem:[#allocation4 + $0x54] sm:$0xf]
    %v436 = vunpack.c.l.b16 %v420
    %v437 = vunpack.c.l.b16 %v421
    %v438 = vunpack.c.l.b16 %v422
    %v439 = vunpack.c.l.b16 %v423
    %v440 = vunpack.c.l.b16 %v424
    %v441 = vunpack.c.l.b16 %v425
    %v442 = vunpack.c.l.b16 %v426
    %v443 = vunpack.c.l.b16 %v427
    %v444 = vpack.c.b16 %v437, %v436
    %v445 = vpack.c.b16 %v439, %v438
    %v446 = vpack.c.b16 %v441, %v440
    %v447 = vpack.c.b16 %v443, %v442
    %vm452 = vcmask 523264
    %v454 = vsel %vm452, %v369, 0
    %456 = vmatpush.bf16.msra.mxu0 0
    %457 = vmatpush.bf16.msra.mxu0 0
    %458 = vmatpush.bf16.msra.mxu0 0
    %459 = vmatpush.bf16.msra.mxu0 0
    %460 = vmatpush.bf16.msra.mxu0 %v447
    %461 = vmatpush.bf16.msra.mxu0 %v446
    %462 = vmatpush.bf16.msra.mxu0 %v445
    %463 = vmatpush.bf16.msra.mxu0 %v444
    %464 = vmatmul.bf16.gmra.mxu0 %v454
    %v465 = vpop.f32.mrf.mxu0
    %v466 = vadd.f32 0.0, %v465
    %v467 = vpop.f32.mrf.mxu0
    %468 = vdwg.mxu0
    %v470 = vunpack.c.l.b16 %v369
    %v471 = vpack.c.b16 %v470, %v470
    %472 = vrot.lane.b32.xlu0 %v471, 64
    %v473 = vpop.permute.xlu0 %472
    %v475 = vsel %vm452, %v473, 0
    %477 = vmatpush.bf16.msra.mxu0 0
    %478 = vmatpush.bf16.msra.mxu0 0
    %479 = vmatpush.bf16.msra.mxu0 0
    %480 = vmatpush.bf16.msra.mxu0 0
    %481 = vmatpush.bf16.msra.mxu0 %v447
    %482 = vmatpush.bf16.msra.mxu0 %v446
    %483 = vmatpush.bf16.msra.mxu0 %v445
    %484 = vmatpush.bf16.msra.mxu0 %v444
    %485 = vmatmul.bf16.gmra.mxu0 %v475
    %v486 = vpop.f32.mrf.mxu0
    %v487 = vadd.f32 0.0, %v486
    %v488 = vpop.f32.mrf.mxu0
    %489 = vdwg.mxu0
    %v490 = vunpack.c.h.b16 %v369
    %v491 = vpack.c.b16 %v490, %v490
    %v493 = vsel %vm452, %v491, 0
    %495 = vmatpush.bf16.msra.mxu0 0
    %496 = vmatpush.bf16.msra.mxu0 0
    %497 = vmatpush.bf16.msra.mxu0 0
    %498 = vmatpush.bf16.msra.mxu0 0
    %499 = vmatpush.bf16.msra.mxu0 %v447
    %500 = vmatpush.bf16.msra.mxu0 %v446
    %501 = vmatpush.bf16.msra.mxu0 %v445
    %502 = vmatpush.bf16.msra.mxu0 %v444
    %503 = vmatmul.bf16.gmra.mxu0 %v493
    %v504 = vpop.f32.mrf.mxu0
    %v505 = vadd.f32 0.0, %v504
    %v506 = vpop.f32.mrf.mxu0
    %507 = vdwg.mxu0
    %508 = vrot.lane.b32.xlu0 %v491, 64
    %v509 = vpop.permute.xlu0 %508
    %v511 = vsel %vm452, %v509, 0
    %513 = vmatpush.bf16.msra.mxu0 0
    %514 = vmatpush.bf16.msra.mxu0 0
    %515 = vmatpush.bf16.msra.mxu0 0
    %516 = vmatpush.bf16.msra.mxu0 0
    %517 = vmatpush.bf16.msra.mxu0 %v447
    %518 = vmatpush.bf16.msra.mxu0 %v446
    %519 = vmatpush.bf16.msra.mxu0 %v445
    %520 = vmatpush.bf16.msra.mxu0 %v444
    %521 = vmatmul.bf16.gmra.mxu0 %v511
    %v522 = vpop.f32.mrf.mxu0
    %v523 = vadd.f32 0.0, %v522
    %v524 = vpop.f32.mrf.mxu0
    %525 = vdwg.mxu0
    %v526 = vperm.slane %v72, 4
    %v527 = vadd.f32 %v466, %v526
    %v528 = vadd.f32 %v487, %v526
    %v529 = vadd.f32 %v505, %v526
    %v530 = vadd.f32 %v523, %v526
    %532 = vrot.lane.b32.xlu0 %v527, 1
    %v533 = vpop.permute.xlu0 %532
    %v535 = vadd.f32 %v530, %v533
    %vm536 = vcmp.ge.f32.partialorder %v535, 0.0
    %v537 = vmul.f32 %v535, 0.1
    %v538 = vsel %vm536, %v535, %v537
    %540 = vrot.lane.b32.xlu0 %v528, 1
    %v541 = vpop.permute.xlu0 %540
    %v543 = vadd.f32 %v530, %v541
    %vm544 = vcmp.ge.f32.partialorder %v543, 0.0
    %v545 = vmul.f32 %v543, 0.1
    %v546 = vsel %vm544, %v543, %v545
    %548 = vrot.lane.b32.xlu0 %v529, 1
    %v549 = vpop.permute.xlu0 %548
    %v551 = vadd.f32 %v530, %v549
    %vm552 = vcmp.ge.f32.partialorder %v551, 0.0
    %v553 = vmul.f32 %v551, 0.1
    %v554 = vsel %vm552, %v551, %v553
    %v555 = vmax.f32 %v538, %v546
    %v556 = vmax.f32 %v555, %v554
    %v557 = vsub.f32 %v538, %v556
    %v558 = vmul.f32 %v557, 1.442695
    %v559 = vpow.pop %v558
    %v560 = vsub.f32 %v546, %v556
    %v561 = vmul.f32 %v560, 1.442695
    %v562 = vpow.pop %v561
    %v563 = vsub.f32 %v554, %v556
    %v564 = vmul.f32 %v563, 1.442695
    %v565 = vpow.pop %v564
    %v566 = vadd.f32 %v559, %v562
    %v567 = vadd.f32 %v566, %v565
    %v568 = vrcp.pop %v567
    %570 = vset.pattern.permute.xlu0 65
    %571 = vperm.xlu0 %570, %v559
    %v572 = vpop.permute.xlu0 %571
    %v574 = vmul.f32 %v572, %v527
    %576 = vset.pattern.permute.xlu0 65
    %577 = vperm.xlu0 %576, %v562
    %v578 = vpop.permute.xlu0 %577
    %v580 = vmul.f32 %v578, %v528
    %v581 = vadd.f32 %v574, %v580
    %583 = vset.pattern.permute.xlu0 65
    %584 = vperm.xlu0 %583, %v565
    %v585 = vpop.permute.xlu0 %584
    %v587 = vmul.f32 %v585, %v529
    %v588 = vadd.f32 %v581, %v587
    %590 = vset.pattern.permute.xlu0 65
    %591 = vperm.xlu0 %590, %v568
    %v592 = vpop.permute.xlu0 %591
    %v594 = vmul.f32 %v588, %v592
    %v595 = vpack.c.bf16 %v594, %v594
    %v596 = vld [vmem:[#allocation6] sm:$0xff]
    %v597 = vld [vmem:[#allocation6 + $0x8] sm:$0xff]
    %v598 = vld [vmem:[#allocation6 + $0x10] sm:$0xff]
    %v599 = vld [vmem:[#allocation6 + $0x18] sm:$0xff]
    %v600 = vld [vmem:[#allocation6 + $0x20] sm:$0xff]
    %v601 = vld [vmem:[#allocation6 + $0x28] sm:$0xff]
    %v602 = vld [vmem:[#allocation6 + $0x30] sm:$0xff]
    %v603 = vld [vmem:[#allocation6 + $0x38] sm:$0xff]
    %v612 = vunpack.c.l.b16 %v596
    %v613 = vunpack.c.h.b16 %v596
    %v614 = vunpack.c.l.b16 %v597
    %v615 = vunpack.c.h.b16 %v597
    %v616 = vunpack.c.l.b16 %v598
    %v617 = vunpack.c.h.b16 %v598
    %v618 = vunpack.c.l.b16 %v599
    %v619 = vunpack.c.h.b16 %v599
    %v620 = vunpack.c.l.b16 %v600
    %v621 = vunpack.c.h.b16 %v600
    %v622 = vunpack.c.l.b16 %v601
    %v623 = vunpack.c.h.b16 %v601
    %v624 = vunpack.c.l.b16 %v602
    %v625 = vunpack.c.h.b16 %v602
    %v626 = vunpack.c.l.b16 %v603
    %v627 = vunpack.c.h.b16 %v603
    %v628 = vpack.c.b16 %v614, %v612
    %v629 = vpack.c.b16 %v615, %v613
    %v630 = vpack.c.b16 %v618, %v616
    %v631 = vpack.c.b16 %v619, %v617
    %v632 = vpack.c.b16 %v622, %v620
    %v633 = vpack.c.b16 %v623, %v621
    %v634 = vpack.c.b16 %v626, %v624
    %v635 = vpack.c.b16 %v627, %v625
    %v645 = vsel %vm452, %v595, 0
    %647 = vmatpush.bf16.msra.mxu0 0
    %648 = vmatpush.bf16.msra.mxu0 0
    %649 = vmatpush.bf16.msra.mxu0 0
    %650 = vmatpush.bf16.msra.mxu0 0
    %651 = vmatpush.bf16.msra.mxu0 %v634
    %652 = vmatpush.bf16.msra.mxu0 %v632
    %653 = vmatpush.bf16.msra.mxu0 %v630
    %654 = vmatpush.bf16.msra.mxu0 %v628
    %655 = vmatmul.bf16.gmra.mxu0 %v645
    %v656 = vpop.f32.mrf.mxu0
    %v657 = vadd.f32 0.0, %v656
    %v658 = vpop.f32.mrf.mxu0
    %659 = vdwg.mxu0
    %660 = vmatpush.bf16.msra.mxu0 0
    %661 = vmatpush.bf16.msra.mxu0 0
    %662 = vmatpush.bf16.msra.mxu0 0
    %663 = vmatpush.bf16.msra.mxu0 0
    %664 = vmatpush.bf16.msra.mxu0 %v635
    %665 = vmatpush.bf16.msra.mxu0 %v633
    %666 = vmatpush.bf16.msra.mxu0 %v631
    %667 = vmatpush.bf16.msra.mxu0 %v629
    %668 = vmatmul.bf16.gmra.mxu0 %v645
    %v669 = vpop.f32.mrf.mxu0
    %v670 = vadd.f32 0.0, %v669
    %v671 = vpop.f32.mrf.mxu0
    %672 = vdwg.mxu0
    %v673 = vadd.f32 %v404, %v657
    %v674 = vadd.f32 %v417, %v670
    %v675 = vld [vmem:[#allocation4 + $0x4] sm:$0xf]
    %v676 = vld [vmem:[#allocation4 + $0x10] sm:$0xf]
    %v677 = vld [vmem:[#allocation4 + $0x1c] sm:$0xf]
    %v678 = vld [vmem:[#allocation4 + $0x28] sm:$0xf]
    %v679 = vld [vmem:[#allocation4 + $0x34] sm:$0xf]
    %v680 = vld [vmem:[#allocation4 + $0x40] sm:$0xf]
    %v681 = vld [vmem:[#allocation4 + $0x4c] sm:$0xf]
    %v682 = vld [vmem:[#allocation4 + $0x58] sm:$0xf]
    %v691 = vunpack.c.l.b16 %v675
    %v692 = vunpack.c.l.b16 %v676
    %v693 = vunpack.c.l.b16 %v677
    %v694 = vunpack.c.l.b16 %v678
    %v695 = vunpack.c.l.b16 %v679
    %v696 = vunpack.c.l.b16 %v680
    %v697 = vunpack.c.l.b16 %v681
    %v698 = vunpack.c.l.b16 %v682
    %v699 = vpack.c.b16 %v692, %v691
    %v700 = vpack.c.b16 %v694, %v693
    %v701 = vpack.c.b16 %v696, %v695
    %v702 = vpack.c.b16 %v698, %v697
    %v708 = vsel %vm452, %v370, 0
    %710 = vmatpush.bf16.msra.mxu0 0
    %711 = vmatpush.bf16.msra.mxu0 0
    %712 = vmatpush.bf16.msra.mxu0 0
    %713 = vmatpush.bf16.msra.mxu0 0
    %714 = vmatpush.bf16.msra.mxu0 %v702
    %715 = vmatpush.bf16.msra.mxu0 %v701
    %716 = vmatpush.bf16.msra.mxu0 %v700
    %717 = vmatpush.bf16.msra.mxu0 %v699
    %718 = vmatmul.bf16.gmra.mxu0 %v708
    %v719 = vpop.f32.mrf.mxu0
    %v720 = vadd.f32 0.0, %v719
    %v721 = vpop.f32.mrf.mxu0
    %722 = vdwg.mxu0
    %v724 = vunpack.c.l.b16 %v370
    %v725 = vpack.c.b16 %v724, %v724
    %726 = vrot.lane.b32.xlu0 %v725, 64
    %v727 = vpop.permute.xlu0 %726
    %v729 = vsel %vm452, %v727, 0
    %731 = vmatpush.bf16.msra.mxu0 0
    %732 = vmatpush.bf16.msra.mxu0 0
    %733 = vmatpush.bf16.msra.mxu0 0
    %734 = vmatpush.bf16.msra.mxu0 0
    %735 = vmatpush.bf16.msra.mxu0 %v702
    %736 = vmatpush.bf16.msra.mxu0 %v701
    %737 = vmatpush.bf16.msra.mxu0 %v700
    %738 = vmatpush.bf16.msra.mxu0 %v699
    %739 = vmatmul.bf16.gmra.mxu0 %v729
    %v740 = vpop.f32.mrf.mxu0
    %v741 = vadd.f32 0.0, %v740
    %v742 = vpop.f32.mrf.mxu0
    %743 = vdwg.mxu0
    %v744 = vunpack.c.h.b16 %v370
    %v745 = vpack.c.b16 %v744, %v744
    %v747 = vsel %vm452, %v745, 0
    %749 = vmatpush.bf16.msra.mxu0 0
    %750 = vmatpush.bf16.msra.mxu0 0
    %751 = vmatpush.bf16.msra.mxu0 0
    %752 = vmatpush.bf16.msra.mxu0 0
    %753 = vmatpush.bf16.msra.mxu0 %v702
    %754 = vmatpush.bf16.msra.mxu0 %v701
    %755 = vmatpush.bf16.msra.mxu0 %v700
    %756 = vmatpush.bf16.msra.mxu0 %v699
    %757 = vmatmul.bf16.gmra.mxu0 %v747
    %v758 = vpop.f32.mrf.mxu0
    %v759 = vadd.f32 0.0, %v758
    %v760 = vpop.f32.mrf.mxu0
    %761 = vdwg.mxu0
    %762 = vrot.lane.b32.xlu0 %v745, 64
    %v763 = vpop.permute.xlu0 %762
    %v765 = vsel %vm452, %v763, 0
    %767 = vmatpush.bf16.msra.mxu0 0
    %768 = vmatpush.bf16.msra.mxu0 0
    %769 = vmatpush.bf16.msra.mxu0 0
    %770 = vmatpush.bf16.msra.mxu0 0
    %771 = vmatpush.bf16.msra.mxu0 %v702
    %772 = vmatpush.bf16.msra.mxu0 %v701
    %773 = vmatpush.bf16.msra.mxu0 %v700
    %774 = vmatpush.bf16.msra.mxu0 %v699
    %775 = vmatmul.bf16.gmra.mxu0 %v765
    %v776 = vpop.f32.mrf.mxu0
    %v777 = vadd.f32 0.0, %v776
    %v778 = vpop.f32.mrf.mxu0
    %779 = vdwg.mxu0
    %v780 = vperm.slane %v72, 5
    %v781 = vadd.f32 %v720, %v780
    %v782 = vadd.f32 %v741, %v780
    %v783 = vadd.f32 %v759, %v780
    %v784 = vadd.f32 %v777, %v780
    %786 = vrot.lane.b32.xlu0 %v781, 1
    %v787 = vpop.permute.xlu0 %786
    %v789 = vadd.f32 %v784, %v787
    %vm790 = vcmp.ge.f32.partialorder %v789, 0.0
    %v791 = vmul.f32 %v789, 0.1
    %v792 = vsel %vm790, %v789, %v791
    %794 = vrot.lane.b32.xlu0 %v782, 1
    %v795 = vpop.permute.xlu0 %794
    %v797 = vadd.f32 %v784, %v795
    %vm798 = vcmp.ge.f32.partialorder %v797, 0.0
    %v799 = vmul.f32 %v797, 0.1
    %v800 = vsel %vm798, %v797, %v799
    %802 = vrot.lane.b32.xlu0 %v783, 1
    %v803 = vpop.permute.xlu0 %802
    %v805 = vadd.f32 %v784, %v803
    %vm806 = vcmp.ge.f32.partialorder %v805, 0.0
    %v807 = vmul.f32 %v805, 0.1
    %v808 = vsel %vm806, %v805, %v807
    %v809 = vmax.f32 %v792, %v800
    %v810 = vmax.f32 %v809, %v808
    %v811 = vsub.f32 %v792, %v810
    %v812 = vmul.f32 %v811, 1.442695
    %v813 = vpow.pop %v812
    %v814 = vsub.f32 %v800, %v810
    %v815 = vmul.f32 %v814, 1.442695
    %v816 = vpow.pop %v815
    %v817 = vsub.f32 %v808, %v810
    %v818 = vmul.f32 %v817, 1.442695
    %v819 = vpow.pop %v818
    %v820 = vadd.f32 %v813, %v816
    %v821 = vadd.f32 %v820, %v819
    %v822 = vrcp.pop %v821
    %824 = vset.pattern.permute.xlu0 65
    %825 = vperm.xlu0 %824, %v813
    %v826 = vpop.permute.xlu0 %825
    %v828 = vmul.f32 %v826, %v781
    %830 = vset.pattern.permute.xlu0 65
    %831 = vperm.xlu0 %830, %v816
    %v832 = vpop.permute.xlu0 %831
    %v834 = vmul.f32 %v832, %v782
    %v835 = vadd.f32 %v828, %v834
    %837 = vset.pattern.permute.xlu0 65
    %838 = vperm.xlu0 %837, %v819
    %v839 = vpop.permute.xlu0 %838
    %v841 = vmul.f32 %v839, %v783
    %v842 = vadd.f32 %v835, %v841
    %844 = vset.pattern.permute.xlu0 65
    %845 = vperm.xlu0 %844, %v822
    %v846 = vpop.permute.xlu0 %845
    %v848 = vmul.f32 %v842, %v846
    %v849 = vpack.c.bf16 %v848, %v848
    %v850 = vld [vmem:[#allocation6 + $0x40] sm:$0xff]
    %v851 = vld [vmem:[#allocation6 + $0x48] sm:$0xff]
    %v852 = vld [vmem:[#allocation6 + $0x50] sm:$0xff]
    %v853 = vld [vmem:[#allocation6 + $0x58] sm:$0xff]
    %v854 = vld [vmem:[#allocation6 + $0x60] sm:$0xff]
    %v855 = vld [vmem:[#allocation6 + $0x68] sm:$0xff]
    %v856 = vld [vmem:[#allocation6 + $0x70] sm:$0xff]
    %v857 = vld [vmem:[#allocation6 + $0x78] sm:$0xff]
    %v866 = vunpack.c.l.b16 %v850
    %v867 = vunpack.c.h.b16 %v850
    %v868 = vunpack.c.l.b16 %v851
    %v869 = vunpack.c.h.b16 %v851
    %v870 = vunpack.c.l.b16 %v852
    %v871 = vunpack.c.h.b16 %v852
    %v872 = vunpack.c.l.b16 %v853
    %v873 = vunpack.c.h.b16 %v853
    %v874 = vunpack.c.l.b16 %v854
    %v875 = vunpack.c.h.b16 %v854
    %v876 = vunpack.c.l.b16 %v855
    %v877 = vunpack.c.h.b16 %v855
    %v878 = vunpack.c.l.b16 %v856
    %v879 = vunpack.c.h.b16 %v856
    %v880 = vunpack.c.l.b16 %v857
    %v881 = vunpack.c.h.b16 %v857
    %v882 = vpack.c.b16 %v868, %v866
    %v883 = vpack.c.b16 %v869, %v867
    %v884 = vpack.c.b16 %v872, %v870
    %v885 = vpack.c.b16 %v873, %v871
    %v886 = vpack.c.b16 %v876, %v874
    %v887 = vpack.c.b16 %v877, %v875
    %v888 = vpack.c.b16 %v880, %v878
    %v889 = vpack.c.b16 %v881, %v879
    %v899 = vsel %vm452, %v849, 0
    %901 = vmatpush.bf16.msra.mxu0 0
    %902 = vmatpush.bf16.msra.mxu0 0
    %903 = vmatpush.bf16.msra.mxu0 0
    %904 = vmatpush.bf16.msra.mxu0 0
    %905 = vmatpush.bf16.msra.mxu0 %v888
    %906 = vmatpush.bf16.msra.mxu0 %v886
    %907 = vmatpush.bf16.msra.mxu0 %v884
    %908 = vmatpush.bf16.msra.mxu0 %v882
    %909 = vmatmul.bf16.gmra.mxu0 %v899
    %v910 = vpop.f32.mrf.mxu0
    %v911 = vadd.f32 0.0, %v910
    %v912 = vpop.f32.mrf.mxu0
    %913 = vdwg.mxu0
    %914 = vmatpush.bf16.msra.mxu0 0
    %915 = vmatpush.bf16.msra.mxu0 0
    %916 = vmatpush.bf16.msra.mxu0 0
    %917 = vmatpush.bf16.msra.mxu0 0
    %918 = vmatpush.bf16.msra.mxu0 %v889
    %919 = vmatpush.bf16.msra.mxu0 %v887
    %920 = vmatpush.bf16.msra.mxu0 %v885
    %921 = vmatpush.bf16.msra.mxu0 %v883
    %922 = vmatmul.bf16.gmra.mxu0 %v899
    %v923 = vpop.f32.mrf.mxu0
    %v924 = vadd.f32 0.0, %v923
    %v925 = vpop.f32.mrf.mxu0
    %926 = vdwg.mxu0
    %v927 = vadd.f32 %v673, %v911
    %v928 = vadd.f32 %v674, %v924
    %v929 = vld [vmem:[#allocation4 + $0x8] sm:$0xf]
    %v930 = vld [vmem:[#allocation4 + $0x14] sm:$0xf]
    %v931 = vld [vmem:[#allocation4 + $0x20] sm:$0xf]
    %v932 = vld [vmem:[#allocation4 + $0x2c] sm:$0xf]
    %v933 = vld [vmem:[#allocation4 + $0x38] sm:$0xf]
    %v934 = vld [vmem:[#allocation4 + $0x44] sm:$0xf]
    %v935 = vld [vmem:[#allocation4 + $0x50] sm:$0xf]
    %v936 = vld [vmem:[#allocation4 + $0x5c] sm:$0xf]
    %v945 = vunpack.c.l.b16 %v929
    %v946 = vunpack.c.l.b16 %v930
    %v947 = vunpack.c.l.b16 %v931
    %v948 = vunpack.c.l.b16 %v932
    %v949 = vunpack.c.l.b16 %v933
    %v950 = vunpack.c.l.b16 %v934
    %v951 = vunpack.c.l.b16 %v935
    %v952 = vunpack.c.l.b16 %v936
    %v953 = vpack.c.b16 %v946, %v945
    %v954 = vpack.c.b16 %v948, %v947
    %v955 = vpack.c.b16 %v950, %v949
    %v956 = vpack.c.b16 %v952, %v951
    %v962 = vsel %vm452, %v371, 0
    %964 = vmatpush.bf16.msra.mxu0 0
    %965 = vmatpush.bf16.msra.mxu0 0
    %966 = vmatpush.bf16.msra.mxu0 0
    %967 = vmatpush.bf16.msra.mxu0 0
    %968 = vmatpush.bf16.msra.mxu0 %v956
    %969 = vmatpush.bf16.msra.mxu0 %v955
    %970 = vmatpush.bf16.msra.mxu0 %v954
    %971 = vmatpush.bf16.msra.mxu0 %v953
    %972 = vmatmul.bf16.gmra.mxu0 %v962
    %v973 = vpop.f32.mrf.mxu0
    %v974 = vadd.f32 0.0, %v973
    %v975 = vpop.f32.mrf.mxu0
    %976 = vdwg.mxu0
    %v978 = vunpack.c.l.b16 %v371
    %v979 = vpack.c.b16 %v978, %v978
    %980 = vrot.lane.b32.xlu0 %v979, 64
    %v981 = vpop.permute.xlu0 %980
    %v983 = vsel %vm452, %v981, 0
    %985 = vmatpush.bf16.msra.mxu0 0
    %986 = vmatpush.bf16.msra.mxu0 0
    %987 = vmatpush.bf16.msra.mxu0 0
    %988 = vmatpush.bf16.msra.mxu0 0
    %989 = vmatpush.bf16.msra.mxu0 %v956
    %990 = vmatpush.bf16.msra.mxu0 %v955
    %991 = vmatpush.bf16.msra.mxu0 %v954
    %992 = vmatpush.bf16.msra.mxu0 %v953
    %993 = vmatmul.bf16.gmra.mxu0 %v983
    %v994 = vpop.f32.mrf.mxu0
    %v995 = vadd.f32 0.0, %v994
    %v996 = vpop.f32.mrf.mxu0
    %997 = vdwg.mxu0
    %v998 = vunpack.c.h.b16 %v371
    %v999 = vpack.c.b16 %v998, %v998
    %v1001 = vsel %vm452, %v999, 0
    %1003 = vmatpush.bf16.msra.mxu0 0
    %1004 = vmatpush.bf16.msra.mxu0 0
    %1005 = vmatpush.bf16.msra.mxu0 0
    %1006 = vmatpush.bf16.msra.mxu0 0
    %1007 = vmatpush.bf16.msra.mxu0 %v956
    %1008 = vmatpush.bf16.msra.mxu0 %v955
    %1009 = vmatpush.bf16.msra.mxu0 %v954
    %1010 = vmatpush.bf16.msra.mxu0 %v953
    %1011 = vmatmul.bf16.gmra.mxu0 %v1001
    %v1012 = vpop.f32.mrf.mxu0
    %v1013 = vadd.f32 0.0, %v1012
    %v1014 = vpop.f32.mrf.mxu0
    %1015 = vdwg.mxu0
    %1016 = vrot.lane.b32.xlu0 %v999, 64
    %v1017 = vpop.permute.xlu0 %1016
    %v1019 = vsel %vm452, %v1017, 0
    %1021 = vmatpush.bf16.msra.mxu0 0
    %1022 = vmatpush.bf16.msra.mxu0 0
    %1023 = vmatpush.bf16.msra.mxu0 0
    %1024 = vmatpush.bf16.msra.mxu0 0
    %1025 = vmatpush.bf16.msra.mxu0 %v956
    %1026 = vmatpush.bf16.msra.mxu0 %v955
    %1027 = vmatpush.bf16.msra.mxu0 %v954
    %1028 = vmatpush.bf16.msra.mxu0 %v953
    %1029 = vmatmul.bf16.gmra.mxu0 %v1019
    %v1030 = vpop.f32.mrf.mxu0
    %v1031 = vadd.f32 0.0, %v1030
    %v1032 = vpop.f32.mrf.mxu0
    %1033 = vdwg.mxu0
    %v1034 = vperm.slane %v72, 6
    %v1035 = vadd.f32 %v974, %v1034
    %v1036 = vadd.f32 %v995, %v1034
    %v1037 = vadd.f32 %v1013, %v1034
    %v1038 = vadd.f32 %v1031, %v1034
    %1040 = vrot.lane.b32.xlu0 %v1035, 1
    %v1041 = vpop.permute.xlu0 %1040
    %v1043 = vadd.f32 %v1038, %v1041
    %vm1044 = vcmp.ge.f32.partialorder %v1043, 0.0
    %v1045 = vmul.f32 %v1043, 0.1
    %v1046 = vsel %vm1044, %v1043, %v1045
    %1048 = vrot.lane.b32.xlu0 %v1036, 1
    %v1049 = vpop.permute.xlu0 %1048
    %v1051 = vadd.f32 %v1038, %v1049
    %vm1052 = vcmp.ge.f32.partialorder %v1051, 0.0
    %v1053 = vmul.f32 %v1051, 0.1
    %v1054 = vsel %vm1052, %v1051, %v1053
    %1056 = vrot.lane.b32.xlu0 %v1037, 1
    %v1057 = vpop.permute.xlu0 %1056
    %v1059 = vadd.f32 %v1038, %v1057
    %vm1060 = vcmp.ge.f32.partialorder %v1059, 0.0
    %v1061 = vmul.f32 %v1059, 0.1
    %v1062 = vsel %vm1060, %v1059, %v1061
    %v1063 = vmax.f32 %v1046, %v1054
    %v1064 = vmax.f32 %v1063, %v1062
    %v1065 = vsub.f32 %v1046, %v1064
    %v1066 = vmul.f32 %v1065, 1.442695
    %v1067 = vpow.pop %v1066
    %v1068 = vsub.f32 %v1054, %v1064
    %v1069 = vmul.f32 %v1068, 1.442695
    %v1070 = vpow.pop %v1069
    %v1071 = vsub.f32 %v1062, %v1064
    %v1072 = vmul.f32 %v1071, 1.442695
    %v1073 = vpow.pop %v1072
    %v1074 = vadd.f32 %v1067, %v1070
    %v1075 = vadd.f32 %v1074, %v1073
    %v1076 = vrcp.pop %v1075
    %1078 = vset.pattern.permute.xlu0 65
    %1079 = vperm.xlu0 %1078, %v1067
    %v1080 = vpop.permute.xlu0 %1079
    %v1082 = vmul.f32 %v1080, %v1035
    %1084 = vset.pattern.permute.xlu0 65
    %1085 = vperm.xlu0 %1084, %v1070
    %v1086 = vpop.permute.xlu0 %1085
    %v1088 = vmul.f32 %v1086, %v1036
    %v1089 = vadd.f32 %v1082, %v1088
    %1091 = vset.pattern.permute.xlu0 65
    %1092 = vperm.xlu0 %1091, %v1073
    %v1093 = vpop.permute.xlu0 %1092
    %v1095 = vmul.f32 %v1093, %v1037
    %v1096 = vadd.f32 %v1089, %v1095
    %1098 = vset.pattern.permute.xlu0 65
    %1099 = vperm.xlu0 %1098, %v1076
    %v1100 = vpop.permute.xlu0 %1099
    %v1102 = vmul.f32 %v1096, %v1100
    %v1103 = vpack.c.bf16 %v1102, %v1102
    %v1104 = vld [vmem:[#allocation6 + $0x80] sm:$0xff]
    %v1105 = vld [vmem:[#allocation6 + $0x88] sm:$0xff]
    %v1106 = vld [vmem:[#allocation6 + $0x90] sm:$0xff]
    %v1107 = vld [vmem:[#allocation6 + $0x98] sm:$0xff]
    %v1108 = vld [vmem:[#allocation6 + $0xa0] sm:$0xff]
    %v1109 = vld [vmem:[#allocation6 + $0xa8] sm:$0xff]
    %v1110 = vld [vmem:[#allocation6 + $0xb0] sm:$0xff]
    %v1111 = vld [vmem:[#allocation6 + $0xb8] sm:$0xff]
    %v1120 = vunpack.c.l.b16 %v1104
    %v1121 = vunpack.c.h.b16 %v1104
    %v1122 = vunpack.c.l.b16 %v1105
    %v1123 = vunpack.c.h.b16 %v1105
    %v1124 = vunpack.c.l.b16 %v1106
    %v1125 = vunpack.c.h.b16 %v1106
    %v1126 = vunpack.c.l.b16 %v1107
    %v1127 = vunpack.c.h.b16 %v1107
    %v1128 = vunpack.c.l.b16 %v1108
    %v1129 = vunpack.c.h.b16 %v1108
    %v1130 = vunpack.c.l.b16 %v1109
    %v1131 = vunpack.c.h.b16 %v1109
    %v1132 = vunpack.c.l.b16 %v1110
    %v1133 = vunpack.c.h.b16 %v1110
    %v1134 = vunpack.c.l.b16 %v1111
    %v1135 = vunpack.c.h.b16 %v1111
    %v1136 = vpack.c.b16 %v1122, %v1120
    %v1137 = vpack.c.b16 %v1123, %v1121
    %v1138 = vpack.c.b16 %v1126, %v1124
    %v1139 = vpack.c.b16 %v1127, %v1125
    %v1140 = vpack.c.b16 %v1130, %v1128
    %v1141 = vpack.c.b16 %v1131, %v1129
    %v1142 = vpack.c.b16 %v1134, %v1132
    %v1143 = vpack.c.b16 %v1135, %v1133
    %v1153 = vsel %vm452, %v1103, 0
    %1155 = vmatpush.bf16.msra.mxu0 0
    %1156 = vmatpush.bf16.msra.mxu0 0
    %1157 = vmatpush.bf16.msra.mxu0 0
    %1158 = vmatpush.bf16.msra.mxu0 0
    %1159 = vmatpush.bf16.msra.mxu0 %v1142
    %1160 = vmatpush.bf16.msra.mxu0 %v1140
    %1161 = vmatpush.bf16.msra.mxu0 %v1138
    %1162 = vmatpush.bf16.msra.mxu0 %v1136
    %1163 = vmatmul.bf16.gmra.mxu0 %v1153
    %v1164 = vpop.f32.mrf.mxu0
    %v1165 = vadd.f32 0.0, %v1164
    %v1166 = vpop.f32.mrf.mxu0
    %1167 = vdwg.mxu0
    %1168 = vmatpush.bf16.msra.mxu0 0
    %1169 = vmatpush.bf16.msra.mxu0 0
    %1170 = vmatpush.bf16.msra.mxu0 0
    %1171 = vmatpush.bf16.msra.mxu0 0
    %1172 = vmatpush.bf16.msra.mxu0 %v1143
    %1173 = vmatpush.bf16.msra.mxu0 %v1141
    %1174 = vmatpush.bf16.msra.mxu0 %v1139
    %1175 = vmatpush.bf16.msra.mxu0 %v1137
    %1176 = vmatmul.bf16.gmra.mxu0 %v1153
    %v1177 = vpop.f32.mrf.mxu0
    %v1178 = vadd.f32 0.0, %v1177
    %v1179 = vpop.f32.mrf.mxu0
    %1180 = vdwg.mxu0
    %v1181 = vadd.f32 %v927, %v1165
    %v1182 = vadd.f32 %v928, %v1178
    %v1183 = vmax.f32 %v1181, 0.0
    %v1184 = vmax.f32 %v1182, 0.0
    %v1185 = vld [vmem:[%s4] sm:$0xff]
    %v1186 = vld [vmem:[%s4 + $0x8] sm:$0xff]
    %v1187 = vld [vmem:[%s4 + $0x10] sm:$0xff]
    %v1188 = vld [vmem:[%s4 + $0x18] sm:$0xff]
    %v1189 = vld [vmem:[%s4 + $0x20] sm:$0xff]
    %v1190 = vld [vmem:[%s4 + $0x28] sm:$0xff]
    %v1191 = vld [vmem:[%s4 + $0x30] sm:$0xff]
    %v1192 = vld [vmem:[%s4 + $0x38] sm:$0xff]
    %v1193 = vld [vmem:[%s4 + $0x40] sm:$0xff]
    %v1194 = vld [vmem:[%s4 + $0x48] sm:$0xff]
    %v1195 = vld [vmem:[%s4 + $0x50] sm:$0xff]
    %v1196 = vld [vmem:[%s4 + $0x58] sm:$0xff]
    %v1197 = vld [vmem:[%s4 + $0x60] sm:$0xff]
    %v1198 = vld [vmem:[%s4 + $0x68] sm:$0xff]
    %v1199 = vld [vmem:[%s4 + $0x70] sm:$0xff]
    %v1200 = vld [vmem:[%s4 + $0x78] sm:$0xff]
    %v1201 = vld [vmem:[%s4 + $0x80] sm:$0xff]
    %v1202 = vld [vmem:[%s4 + $0x88] sm:$0xff]
    %v1203 = vld [vmem:[%s4 + $0x90] sm:$0xff]
    %v1204 = vld [vmem:[%s4 + $0x98] sm:$0xff]
    %v1205 = vld [vmem:[%s4 + $0xa0] sm:$0xff]
    %v1206 = vld [vmem:[%s4 + $0xa8] sm:$0xff]
    %v1207 = vld [vmem:[%s4 + $0xb0] sm:$0xff]
    %v1208 = vld [vmem:[%s4 + $0xb8] sm:$0xff]
    %v1209 = vld [vmem:[%s4 + $0xc0] sm:$0xff]
    %v1210 = vld [vmem:[%s4 + $0xc8] sm:$0xff]
    %v1211 = vld [vmem:[%s4 + $0xd0] sm:$0xff]
    %v1212 = vld [vmem:[%s4 + $0xd8] sm:$0xff]
    %v1213 = vld [vmem:[%s4 + $0xe0] sm:$0xff]
    %v1214 = vld [vmem:[%s4 + $0xe8] sm:$0xff]
    %v1215 = vld [vmem:[%s4 + $0xf0] sm:$0xff]
    %v1216 = vld [vmem:[%s4 + $0xf8] sm:$0xff]
    %v1217 = vperm.slane %v78, 0
    %1218 = vmatpush.msra.mxu0 %v1200
    %1219 = vmatpush.msra.mxu0 %v1199
    %1220 = vmatpush.msra.mxu0 %v1198
    %1221 = vmatpush.msra.mxu0 %v1197
    %1222 = vmatpush.msra.mxu0 %v1196
    %1223 = vmatpush.msra.mxu0 %v1195
    %1224 = vmatpush.msra.mxu0 %v1194
    %1225 = vmatpush.msra.mxu0 %v1193
    %1226 = vmatpush.msra.mxu0 %v1192
    %1227 = vmatpush.msra.mxu0 %v1191
    %1228 = vmatpush.msra.mxu0 %v1190
    %1229 = vmatpush.msra.mxu0 %v1189
    %1230 = vmatpush.msra.mxu0 %v1188
    %1231 = vmatpush.msra.mxu0 %v1187
    %1232 = vmatpush.msra.mxu0 %v1186
    %1233 = vmatpush.msra.mxu0 %v1185
    %1234 = vmatmul.f32.gmra.mxu0 %v1183
    %v1235 = vpop.f32.mrf.mxu0
    %v1236 = vadd.f32 %v1217, %v1235
    %1237 = vdwg.mxu0
    %1238 = vmatpush.msra.mxu0 %v1216
    %1239 = vmatpush.msra.mxu0 %v1215
    %1240 = vmatpush.msra.mxu0 %v1214
    %1241 = vmatpush.msra.mxu0 %v1213
    %1242 = vmatpush.msra.mxu0 %v1212
    %1243 = vmatpush.msra.mxu0 %v1211
    %1244 = vmatpush.msra.mxu0 %v1210
    %1245 = vmatpush.msra.mxu0 %v1209
    %1246 = vmatpush.msra.mxu0 %v1208
    %1247 = vmatpush.msra.mxu0 %v1207
    %1248 = vmatpush.msra.mxu0 %v1206
    %1249 = vmatpush.msra.mxu0 %v1205
    %1250 = vmatpush.msra.mxu0 %v1204
    %1251 = vmatpush.msra.mxu0 %v1203
    %1252 = vmatpush.msra.mxu0 %v1202
    %1253 = vmatpush.msra.mxu0 %v1201
    %1254 = vmatmul.f32.gmra.mxu0 %v1184
    %v1255 = vpop.f32.mrf.mxu0
    %v1256 = vadd.f32 %v1236, %v1255
    %1257 = vdwg.mxu0
    %v1258 = vtanh.pop %v1256
    %vm1259 = vcmask 31744
    %1260 = vst.msk [vmem:[%s5] sm:$0xff] %vm1259, %v1258
    // Predicated region
    $region34: #{tpu_custom_call.1} parent=1 // pred_check
      _
    $region35: #{tpu_custom_call.1} parent=1 // pred_check_branch
      %1262 = sbr.rel (0) target = $region37
    $region36: #{tpu_custom_call.1} parent=1 // pred_region
      _
    $region37: #{tpu_custom_call.1} parent=1 // pred_fallthru
      _
    // Predicated region
    $region38: #{tpu_custom_call.1} parent=1 // pred_check
      _
    $region39: #{tpu_custom_call.1} parent=1 // pred_check_branch
      %1264 = sbr.rel (0) target = $region41
    $region40: #{tpu_custom_call.1} parent=1 // pred_region
      _
    $region41: #{tpu_custom_call.1} parent=1 // pred_fallthru
      _
    %1265 = vsyncpa [#allocation3], 1
    %1266 = vsyncpa [#allocation5], 1

</llo_original>
